<compile_context>
chip_gen: v5e
topology: v5e:2x2
jax: 0.10.0
libtpu: 0.0.40
codegen_flags: <defaults>
</compile_context>

<pallas_src>
import functools
import math

import jax
import jax.numpy as jnp
from jax import lax
from jax.experimental import pallas as pl
from jax.experimental.pallas import tpu as pltpu


# ----------------------------- Pallas kernel --------------------------------
def _augment_kernel(scal_ref, band_ref, taps_ref, img_ref, o_ref,
                    band_buf, sem, *, c_img, row_align):
    # scal_ref : SMEM (2,)   f32    [alpha, beta]
    # band_ref : SMEM (nt,)  int32  per-tile source-row band start
    # taps_ref : VMEM (th, tw, 8) f32  [y0, y1, x0, x1, wy0, wy1, wx0, wx1]
    #            (y0/y1 band-relative rows, x0/x1 absolute source columns)
    # img_ref  : HBM  (Hin, Ct*Win) bf16  channel-major lane blocks
    # o_ref    : VMEM (Ct, th, tw) f32    lane-dense output tile
    # band_buf : VMEM (bh, Ct*Win) bf16 scratch
    # sem      : DMA semaphore
    i = pl.program_id(0)
    row0 = band_ref[i]
    if row_align > 1:
        row0 = pl.multiple_of(row0, row_align)
    alpha = scal_ref[0]          # scalar reads before the DMA wait
    beta = scal_ref[1]

    bh, CW = band_buf.shape
    Ct, th, tw = o_ref.shape
    tp = th * tw
    Win = CW // Ct

    # Kick off the row-band DMA; the tap-weight construction below is pure VPU
    # work that does not need the image, so it overlaps with the copy.
    cp = pltpu.make_async_copy(img_ref.at[pl.ds(row0, bh), :], band_buf, sem)
    cp.start()

    taps = taps_ref[...].reshape(tp, 8)
    ti = taps[:, 0:4].astype(jnp.int32)

    # Vertical (row) bilinear weights: (tp, bh), two non-zeros per row.
    r = lax.broadcasted_iota(jnp.int32, (tp, bh), 1)
    wy = (jnp.where(r == ti[:, 0:1], taps[:, 4:5], 0.0)
          + jnp.where(r == ti[:, 1:2], taps[:, 5:6], 0.0))

    # Horizontal (col) bilinear weights, built ONCE at (tp, Win) and broadcast
    # over channel blocks later (v2 rebuilt this Ct times over (tp, Ct*Win)).
    c = lax.broadcasted_iota(jnp.int32, (tp, Win), 1)
    wx = (jnp.where(c == ti[:, 2:3], taps[:, 6:7], 0.0)
          + jnp.where(c == ti[:, 3:4], taps[:, 7:8], 0.0))

    cp.wait()

    # Row blend on the MXU: bf16 x bf16 -> f32 accumulator, (tp, bh)@(bh, CW).
    t1 = jnp.dot(wy.astype(jnp.bfloat16), band_buf[...],
                 preferred_element_type=jnp.float32)

    # Column blend: per-channel weighted segment sum on the VPU/XLU
    # (replaces the v2 N=Ct matmul at <3% MXU utilization).
    out = jnp.sum(t1.reshape(tp, Ct, Win) * wx.reshape(tp, 1, Win), axis=-1)

    # Photometric epilogue on the image channels only; mask channels pass
    # through unclipped (geometric-only, as in albumentations).
    cidx = lax.broadcasted_iota(jnp.int32, (tp, Ct), 1)
    out = jnp.where(cidx < c_img, jnp.clip(alpha * out + beta, 0.0, 1.0), out)

    # Lane-dense store: transpose the tiny (tp, Ct) result AFTER the reduction.
    o_ref[...] = out.T.reshape(Ct, th, tw)


# ----------------------------- tiling helpers -------------------------------
def _pick_row_tile(Hc, Wc, target_pixels=512):
    """Largest multiple of 8 dividing Hc with roughly <= target_pixels per tile."""
    cap = max(8, (target_pixels // max(Wc, 1)) // 8 * 8)
    best, d = 8, 8
    while d <= min(Hc, cap):
        if Hc % d == 0:
            best = d
        d += 8
    return best


def _band_height(th, Wc, Hin, Ht):
    """Static worst-case source-row extent of a (th x Wc) crop tile."""
    # |rotate| <= 45deg and scale >= 0.95 bound the target-space extent by the
    # tile diagonal / 0.95; flips/rot90 are isometries; resize scales by Hin/Ht.
    diag = math.hypot(th - 1, Wc - 1)
    extent = diag / 0.95 * (Hin / float(Ht)) + 2.0   # +2: two taps + flooring
    bh = int(math.ceil(extent)) + 8                  # +8: band start aligned down
    bh = ((bh + 7) // 8) * 8
    return min(bh, Hin)


# ------------------------------ kernel wrapper -------------------------------
def _apply_kernel(taps, band_start, img_prep, alpha, beta, *, c_img, c_tot, th, bh):
    Hc, Wc, _ = taps.shape
    Hin, CW = img_prep.shape
    Win = CW // c_tot
    n_tiles = Hc // th
    tp = th * Wc

    scal = jnp.stack([alpha, beta]).astype(jnp.float32)

    # VMEM budget: double-buffered taps / output blocks + band buffer + temps.
    est = (2 * tp * 8 * 4 + 2 * c_tot * tp * 4 + bh * CW * 2
           + tp * (bh + Win + 3 * CW) * 4)
    vmem_limit = int(min(56 * 2 ** 20, max(2 * est, 8 * 2 ** 20)))

    P = Hc * Wc
    cost = pl.CostEstimate(
        flops=2 * P * bh * CW + 8 * P * Win + 4 * P * c_tot,
        transcendentals=0,
        bytes_accessed=Hin * CW * 2 + P * 8 * 4 + P * c_tot * 4)

    kernel = functools.partial(_augment_kernel, c_img=int(c_img),
                               row_align=8 if Hin % 8 == 0 else 1)
    return pl.pallas_call(
        kernel,
        out_shape=jax.ShapeDtypeStruct((c_tot, Hc, Wc), jnp.float32),
        grid=(n_tiles,),
        in_specs=[
            pl.BlockSpec(memory_space=pltpu.MemorySpace.SMEM),    # (alpha, beta)
            pl.BlockSpec(memory_space=pltpu.MemorySpace.SMEM),    # band starts
            pl.BlockSpec((th, Wc, 8), lambda i: (i, 0, 0)),        # merged taps
            pl.BlockSpec(memory_space=pl.ANY),                     # image (HBM)
        ],
        out_specs=pl.BlockSpec((c_tot, th, Wc), lambda i: (0, i, 0)),
        scratch_shapes=[
            pltpu.VMEM((bh, CW), jnp.bfloat16),                    # row band
            pltpu.SemaphoreType.DMA,
        ],
        compiler_params=pltpu.CompilerParams(
            dimension_semantics=("parallel",),
            vmem_limit_bytes=vmem_limit),
        cost_estimate=cost,
    )(scal, band_start.astype(jnp.int32), taps.astype(jnp.float32), img_prep)


# -------------------------------- Module port --------------------------------
class BaseAugmentPipe:
    def __init__(self, target_size, use_augment, crop_rate=0.8, object_type="object"):
        assert object_type in ("object", "texture")
        # RandomRotate90 needs a square target to keep shapes static.
        assert target_size[0] == target_size[1]
        self.target_size = (int(target_size[0]), int(target_size[1]))
        self.use_augment = bool(use_augment)
        self.object_type = object_type
        ch = (int(target_size[0] * crop_rate) // 8) * 8
        cw = (int(target_size[1] * crop_rate) // 8) * 8
        self.crop_size = (ch, cw)

    # Per-output-pixel source coordinates + photometric (alpha, beta).  Random
    # decisions use jax.random (albumentations' exact RNG stream is not
    # reproducible here).
    def _build_coords(self, key, in_hw):
        f32 = jnp.float32
        Hin, Win = in_hw
        Ht, Wt = self.target_size
        Hc, Wc = self.crop_size
        k = jax.random.split(key, 14)

        if self.use_augment:
            do_vflip = jax.random.bernoulli(k[0], 0.5)
            do_hflip = jax.random.bernoulli(k[1], 0.5)
            do_rot90 = jax.random.bernoulli(k[2], 0.5)
            rot_k = jnp.where(do_rot90, jax.random.randint(k[3], (), 0, 4), 0)
            do_bc = jax.random.bernoulli(k[4], 0.5)
            # TODO(synk): RandomBrightnessContrast modeled as global alpha/beta;
            # albumentations applies contrast about the per-image mean.
            alpha = jnp.where(do_bc, 1.0 + jax.random.uniform(k[5], (), minval=-0.05, maxval=0.05), 1.0)
            beta = jnp.where(do_bc, jax.random.uniform(k[6], (), minval=-0.05, maxval=0.05), 0.0)
            if self.object_type == "object":
                do_ssr = jax.random.bernoulli(k[7], 0.5)
                angle = jnp.where(do_ssr, jax.random.uniform(k[8], (), minval=-45.0, maxval=45.0), 0.0)
                scale = jnp.where(do_ssr, 1.0 + jax.random.uniform(k[9], (), minval=-0.05, maxval=0.05), 1.0)
                sh = jnp.where(do_ssr, jax.random.uniform(k[10], (2,), minval=-0.05, maxval=0.05),
                               jnp.zeros(2, f32))
                dy, dx = sh[0] * Ht, sh[1] * Wt
            else:
                angle, scale, dy, dx = f32(0.0), f32(1.0), f32(0.0), f32(0.0)
        else:
            do_vflip = jnp.bool_(False)
            do_hflip = jnp.bool_(False)
            rot_k = jnp.int32(0)
            alpha, beta = f32(1.0), f32(0.0)
            angle, scale, dy, dx = f32(0.0), f32(1.0), f32(0.0), f32(0.0)

        crop_top = jax.random.randint(k[11], (), 0, Ht - Hc + 1)
        crop_left = jax.random.randint(k[12], (), 0, Wt - Wc + 1)

        # crop-space pixel grid -> target-space coordinates
        ii, jj = jnp.meshgrid(jnp.arange(Hc, dtype=f32), jnp.arange(Wc, dtype=f32), indexing="ij")
        y = ii + crop_top.astype(f32)
        x = jj + crop_left.astype(f32)

        # inverse ShiftScaleRotate (about target-image center)
        # TODO(synk): cv2 BORDER_REFLECT_101 is approximated by clamping (replicate).
        cy, cx = (Ht - 1) / 2.0, (Wt - 1) / 2.0
        theta = -angle * jnp.pi / 180.0
        ct, st = jnp.cos(theta), jnp.sin(theta)
        yd = y - cy - dy
        xd = x - cx - dx
        xs = (ct * xd - st * yd) / scale
        ys = (st * xd + ct * yd) / scale
        x = xs + cx
        y = ys + cy

        # inverse RandomRotate90 (square target)
        N = f32(Ht - 1)
        conds = [rot_k == 0, rot_k == 1, rot_k == 2, rot_k == 3]
        y_r = jnp.select(conds, [y, x, N - y, N - x])
        x_r = jnp.select(conds, [x, N - y, N - x, y])
        y, x = y_r, x_r

        # inverse flips
        x = jnp.where(do_hflip, (Wt - 1.0) - x, x)
        y = jnp.where(do_vflip, (Ht - 1.0) - y, y)

        # inverse Resize (target coords -> input coords, bilinear convention)
        y = (y + 0.5) * (Hin / Ht) - 0.5
        x = (x + 0.5) * (Win / Wt) - 0.5
        return y, x, jnp.asarray(alpha, f32), jnp.asarray(beta, f32)

    def forward(self, key, image, mask=None):
        Hin, Win, Cimg = image.shape
        Hc, Wc = self.crop_size
        Ht, _ = self.target_size
        y, x, alpha, beta = self._build_coords(key, (Hin, Win))     # (Hc, Wc)

        # Fuse image + mask channels so the sampling geometry is applied once.
        chans = [image.astype(jnp.float32)]
        mask_trailing = None
        if mask is not None:
            mask_trailing = mask.shape[2:]
            # TODO(synk): albumentations uses nearest-neighbor interp for masks; bilinear used here.
            chans.append(mask.astype(jnp.float32).reshape(Hin, Win, -1))
        stacked = jnp.concatenate(chans, axis=2)                     # (Hin, Win, Ct)
        Ct = stacked.shape[2]
        # channel-major lane blocks (Hin, Ct*Win); bf16 halves DMA + residency
        img_prep = jnp.transpose(stacked, (0, 2, 1)).reshape(Hin, Ct * Win)
        img_prep = img_prep.astype(jnp.bfloat16)

        # --- tiling (crop row blocks) and per-tile source-row band ---
        th = _pick_row_tile(Hc, Wc)
        bh = _band_height(th, Wc, Hin, Ht)
        n_tiles = Hc // th

        # 4-tap bilinear parameters (no dense sampling matrix is ever built)
        y = jnp.clip(y, 0.0, Hin - 1.0)
        x = jnp.clip(x, 0.0, Win - 1.0)
        y0 = jnp.floor(y)
        x0 = jnp.floor(x)
        y0i = y0.astype(jnp.int32)
        x0i = x0.astype(jnp.int32)
        y1i = jnp.minimum(y0i + 1, Hin - 1)
        x1i = jnp.minimum(x0i + 1, Win - 1)
        fy = (y - y0).astype(jnp.float32)
        fx = (x - x0).astype(jnp.float32)

        # Per-tile band start (aligned down to 8, clamped so the band fits).
        row_min = jnp.min(y0i.reshape(n_tiles, th * Wc), axis=1)
        band_start = jnp.clip((row_min // 8) * 8, 0, Hin - bh).astype(jnp.int32)
        bs_pix = jnp.repeat(band_start, th)[:, None]                 # (Hc, 1)
        y0r = jnp.clip(y0i - bs_pix, 0, bh - 1)
        y1r = jnp.clip(y1i - bs_pix, 0, bh - 1)

        # Merged taps block: indices stored as f32 (exact for these ranges).
        taps = jnp.stack([y0r.astype(jnp.float32), y1r.astype(jnp.float32),
                          x0i.astype(jnp.float32), x1i.astype(jnp.float32),
                          1.0 - fy, fy, 1.0 - fx, fx], axis=-1)      # (Hc, Wc, 8)

        out = _apply_kernel(taps, band_start, img_prep, alpha, beta,
                            c_img=Cimg, c_tot=Ct, th=th, bh=bh)      # (Ct, Hc, Wc)
        out = jnp.transpose(out, (1, 2, 0))                          # HWC
        out_img = out[..., :Cimg]
        if mask is None:
            return out_img
        out_mask = out[..., Cimg:].reshape((Hc, Wc) + mask_trailing)
        return out_img, out_mask


# ---------------------------------- main -------------------------------------
if __name__ == "__main__":
    key = jax.random.PRNGKey(0)
    k_img, k_mask, k_aug = jax.random.split(key, 3)

    image = jax.random.uniform(k_img, (16, 16, 3), dtype=jnp.float32)       # HWC in [0,1]
    mask = (jax.random.uniform(k_mask, (16, 16)) > 0.5).astype(jnp.float32)

    pipe = BaseAugmentPipe(target_size=(16, 16), use_augment=True,
                           crop_rate=0.8, object_type="object")
    out_img, out_mask = pipe.forward(k_aug, image, mask)
    jax.block_until_ready(out_img)
    jax.block_until_ready(out_mask)

    assert out_img.shape == (8, 8, 3), out_img.shape
    assert out_mask.shape == (8, 8), out_mask.shape
    assert bool(jnp.all(jnp.isfinite(out_img)))
    assert bool(jnp.all(jnp.isfinite(out_mask)))
    print("KERNEL_OK")
</pallas_src>

<mosaic_0001>
module attributes {stable_mosaic.version = 11 : i64} {
  func.func @_augment_kernel(%arg0: i32, %arg1: memref<2xf32, #tpu.memory_space<smem>>, %arg2: memref<1xi32, #tpu.memory_space<smem>>, %arg3: memref<8x8x8xf32, #tpu.memory_space<vmem>>, %arg4: memref<16x64xbf16, #tpu.memory_space<any>>, %arg5: memref<4x8x8xf32, #tpu.memory_space<vmem>>, %arg6: memref<16x64xbf16, #tpu.memory_space<vmem>>, %arg7: memref<!tpu.dma_semaphore, #tpu.memory_space<semaphore_mem>>) attributes {dimension_semantics = [#tpu.dimension_semantics<parallel>], iteration_bounds = array<i64: 1>, scalar_prefetch = 0 : i64, scratch_operands = 2 : i64, tpu.core_type = #tpu.core_type<tc>, window_params = [{transform_indices = @transform_0, window_bounds = array<i64: 2>}, {transform_indices = @transform_1, window_bounds = array<i64: 1>}, {transform_indices = @transform_2, window_bounds = array<i64: 8, 8, 8>}, {}, {transform_indices = @transform_4, window_bounds = array<i64: 4, 8, 8>}]} {
    %0 = arith.index_cast %arg0 : i32 to index
    %1 = memref.load %arg2[%0] : memref<1xi32, #tpu.memory_space<smem>>
    %2 = tpu.assume_multiple %1, 8 : i32
    %c0 = arith.constant 0 : index
    %3 = memref.load %arg1[%c0] : memref<2xf32, #tpu.memory_space<smem>>
    %c1 = arith.constant 1 : index
    %4 = memref.load %arg1[%c1] : memref<2xf32, #tpu.memory_space<smem>>
    %c0_i32 = arith.constant 0 : i32
    %5 = tpu.memref_slice %arg4[%2, %c0_i32] : memref<16x64xbf16, #tpu.memory_space<any>> -> memref<16x64xbf16, #tpu.memory_space<any>>
    tpu.enqueue_dma source(%5 : memref<16x64xbf16, #tpu.memory_space<any>>) target(%arg6 : memref<16x64xbf16, #tpu.memory_space<vmem>>) target_semaphore(%arg7 : memref<!tpu.dma_semaphore, #tpu.memory_space<semaphore_mem>>)
    %c0_0 = arith.constant 0 : index
    %c0_1 = arith.constant 0 : index
    %c0_2 = arith.constant 0 : index
    %6 = vector.load %arg3[%c0_0, %c0_1, %c0_2] : memref<8x8x8xf32, #tpu.memory_space<vmem>>, vector<8x8x8xf32>
    %7 = vector.shape_cast %6 : vector<8x8x8xf32> to vector<64x8xf32>
    %8 = vector.extract_strided_slice %7 {offsets = [0, 0], sizes = [64, 4], strides = [1, 1]} : vector<64x8xf32> to vector<64x4xf32>
    %9 = arith.fptosi %8 : vector<64x4xf32> to vector<64x4xi32>
    %10 = tpu.iota {dimensions = array<i32: 1>} : vector<64x16xi32>
    %11 = vector.extract_strided_slice %9 {offsets = [0, 0], sizes = [64, 1], strides = [1, 1]} : vector<64x4xi32> to vector<64x1xi32>
    %12 = vector.broadcast %11 : vector<64x1xi32> to vector<64x16xi32>
    %13 = arith.cmpi eq, %10, %12 : vector<64x16xi32>
    %14 = vector.extract_strided_slice %7 {offsets = [0, 4], sizes = [64, 1], strides = [1, 1]} : vector<64x8xf32> to vector<64x1xf32>
    %cst = arith.constant 0.000000e+00 : f32
    %15 = vector.shape_cast %14 : vector<64x1xf32> to vector<64x1xf32>
    %16 = vector.broadcast %15 : vector<64x1xf32> to vector<64x16xf32>
    %17 = vector.broadcast %cst : f32 to vector<64x16xf32>
    %18 = arith.select %13, %16, %17 : vector<64x16xi1>, vector<64x16xf32>
    %19 = vector.extract_strided_slice %9 {offsets = [0, 1], sizes = [64, 1], strides = [1, 1]} : vector<64x4xi32> to vector<64x1xi32>
    %20 = vector.broadcast %19 : vector<64x1xi32> to vector<64x16xi32>
    %21 = arith.cmpi eq, %10, %20 : vector<64x16xi32>
    %22 = vector.extract_strided_slice %7 {offsets = [0, 5], sizes = [64, 1], strides = [1, 1]} : vector<64x8xf32> to vector<64x1xf32>
    %cst_3 = arith.constant 0.000000e+00 : f32
    %23 = vector.shape_cast %22 : vector<64x1xf32> to vector<64x1xf32>
    %24 = vector.broadcast %23 : vector<64x1xf32> to vector<64x16xf32>
    %25 = vector.broadcast %cst_3 : f32 to vector<64x16xf32>
    %26 = arith.select %21, %24, %25 : vector<64x16xi1>, vector<64x16xf32>
    %27 = arith.addf %18, %26 : vector<64x16xf32>
    %28 = tpu.iota {dimensions = array<i32: 1>} : vector<64x16xi32>
    %29 = vector.extract_strided_slice %9 {offsets = [0, 2], sizes = [64, 1], strides = [1, 1]} : vector<64x4xi32> to vector<64x1xi32>
    %30 = vector.broadcast %29 : vector<64x1xi32> to vector<64x16xi32>
    %31 = arith.cmpi eq, %28, %30 : vector<64x16xi32>
    %32 = vector.extract_strided_slice %7 {offsets = [0, 6], sizes = [64, 1], strides = [1, 1]} : vector<64x8xf32> to vector<64x1xf32>
    %cst_4 = arith.constant 0.000000e+00 : f32
    %33 = vector.shape_cast %32 : vector<64x1xf32> to vector<64x1xf32>
    %34 = vector.broadcast %33 : vector<64x1xf32> to vector<64x16xf32>
    %35 = vector.broadcast %cst_4 : f32 to vector<64x16xf32>
    %36 = arith.select %31, %34, %35 : vector<64x16xi1>, vector<64x16xf32>
    %37 = vector.extract_strided_slice %9 {offsets = [0, 3], sizes = [64, 1], strides = [1, 1]} : vector<64x4xi32> to vector<64x1xi32>
    %38 = vector.broadcast %37 : vector<64x1xi32> to vector<64x16xi32>
    %39 = arith.cmpi eq, %28, %38 : vector<64x16xi32>
    %40 = vector.extract_strided_slice %7 {offsets = [0, 7], sizes = [64, 1], strides = [1, 1]} : vector<64x8xf32> to vector<64x1xf32>
    %cst_5 = arith.constant 0.000000e+00 : f32
    %41 = vector.shape_cast %40 : vector<64x1xf32> to vector<64x1xf32>
    %42 = vector.broadcast %41 : vector<64x1xf32> to vector<64x16xf32>
    %43 = vector.broadcast %cst_5 : f32 to vector<64x16xf32>
    %44 = arith.select %39, %42, %43 : vector<64x16xi1>, vector<64x16xf32>
    %45 = arith.addf %36, %44 : vector<64x16xf32>
    %c0_i32_6 = arith.constant 0 : i32
    %46 = tpu.memref_slice %arg4[%2, %c0_i32_6] : memref<16x64xbf16, #tpu.memory_space<any>> -> memref<16x64xbf16, #tpu.memory_space<any>>
    tpu.wait_dma2 semaphore(%arg7 : memref<!tpu.dma_semaphore, #tpu.memory_space<semaphore_mem>>) src(%46 : memref<16x64xbf16, #tpu.memory_space<any>>) dst(%arg6 : memref<16x64xbf16, #tpu.memory_space<vmem>>)
    %47 = arith.truncf %27 : vector<64x16xf32> to vector<64x16xbf16>
    %c0_7 = arith.constant 0 : index
    %c0_8 = arith.constant 0 : index
    %48 = vector.load %arg6[%c0_7, %c0_8] : memref<16x64xbf16, #tpu.memory_space<vmem>>, vector<16x64xbf16>
    %cst_9 = arith.constant dense<0.000000e+00> : vector<64x64xf32>
    %49 = tpu.matmul %47, %48, %cst_9 {dimension_numbers = #tpu.dot_dimension_numbers<[1], [0], [0], [1], [0, 0, 1, 1], [], []>} : vector<64x16xbf16>, vector<16x64xbf16>, vector<64x64xf32> -> vector<64x64xf32>
    %50 = vector.shape_cast %49 : vector<64x64xf32> to vector<64x4x16xf32>
    %51 = vector.shape_cast %45 : vector<64x16xf32> to vector<64x1x16xf32>
    %52 = vector.broadcast %51 : vector<64x1x16xf32> to vector<64x4x16xf32>
    %53 = arith.mulf %50, %52 : vector<64x4x16xf32>
    %cst_10 = arith.constant dense<0.000000e+00> : vector<64x4xf32>
    %54 = vector.multi_reduction <add>, %53, %cst_10 [2] : vector<64x4x16xf32> to vector<64x4xf32>
    %55 = tpu.iota {dimensions = array<i32: 1>} : vector<64x4xi32>
    %c3_i32 = arith.constant 3 : i32
    %56 = vector.broadcast %c3_i32 : i32 to vector<64x4xi32>
    %57 = arith.cmpi slt, %55, %56 : vector<64x4xi32>
    %58 = vector.broadcast %3 : f32 to vector<64x4xf32>
    %59 = arith.mulf %58, %54 : vector<64x4xf32>
    %60 = vector.broadcast %4 : f32 to vector<64x4xf32>
    %61 = arith.addf %59, %60 : vector<64x4xf32>
    %cst_11 = arith.constant 0.000000e+00 : f32
    %cst_12 = arith.constant 1.000000e+00 : f32
    %62 = vector.broadcast %cst_11 : f32 to vector<64x4xf32>
    %63 = arith.maximumf %62, %61 : vector<64x4xf32>
    %64 = vector.broadcast %cst_12 : f32 to vector<64x4xf32>
    %65 = arith.minimumf %64, %63 : vector<64x4xf32>
    %66 = arith.select %57, %65, %54 : vector<64x4xi1>, vector<64x4xf32>
    %67 = tpu.transpose %66, [1, 0] : vector<64x4xf32> -> vector<4x64xf32>
    %68 = vector.shape_cast %67 : vector<4x64xf32> to vector<4x8x8xf32>
    %c0_13 = arith.constant 0 : index
    %c0_14 = arith.constant 0 : index
    %c0_15 = arith.constant 0 : index
    %69 = vector.load %arg5[%c0_13, %c0_14, %c0_15] : memref<4x8x8xf32, #tpu.memory_space<vmem>>, vector<4x8x8xf32>
    tpu.vector_store %arg5[%c0_13, %c0_14, %c0_15], %68 {strides = array<i32>} : memref<4x8x8xf32, #tpu.memory_space<vmem>>, vector<4x8x8xf32>,
    return
  }
  func.func @transform_0(%arg0: i32) -> i32 {
    %c0_i32 = arith.constant 0 : i32
    %c0_i32_0 = arith.constant 0 : i32
    return %c0_i32 : i32
  }
  func.func @transform_1(%arg0: i32) -> i32 {
    %c0_i32 = arith.constant 0 : i32
    %c0_i32_0 = arith.constant 0 : i32
    return %c0_i32 : i32
  }
  func.func @transform_2(%arg0: i32) -> (i32, i32, i32) {
    %c0_i32 = arith.constant 0 : i32
    %c0_i32_0 = arith.constant 0 : i32
    %c0_i32_1 = arith.constant 0 : i32
    return %arg0, %c0_i32, %c0_i32_0 : i32, i32, i32
  }
  func.func @transform_4(%arg0: i32) -> (i32, i32, i32) {
    %c0_i32 = arith.constant 0 : i32
    %c0_i32_0 = arith.constant 0 : i32
    %c0_i32_1 = arith.constant 0 : i32
    return %c0_i32, %arg0, %c0_i32_0 : i32, i32, i32
  }
}

</mosaic_0001>

<llo_original>
// kernel: tpu_custom_call.1
$region0: #{tpu_custom_call.1}
  #allocation0 [shape = 'u32[]', space=smem, size = 0x4, offset = 0x4, fixed_abs, tag = 'smem constant byte address 0x4 - core index']
  #allocation1 [shape = 'u32[72,128]{1,0:T(1,128)}', space=vmem, size = 0x9000, scoped, tag = 'internal scratch']
  #allocation2 [shape = 'bf16[16,64]{1,0:T(8,128)(2,1)}', space=vmem, size = 0x1000, scoped, tag = 'scratch operand']
  #allocation3 [shape = 's32[1]{0}', space=sflag, size = 0x4, scoped, tag = 'scratch operand']
  #allocation4 [shape = 's32[1]{0:T(128)S(6)}', space=smem, size = 0x200, scoped, tag = 'scoped memory for tpu_custom_call.1']
  #allocation11 [shape = 's32[]', space=sflag, size = 0x4, offset = 0, fixed_abs, tag = 'sflag constant byte address 0x0 - dummy sync flag']
  #allocation12 [shape = 's32[]', space=sflag, size = 0x4, offset = 0, fixed_abs, tag = 'sflag constant byte address 0x0 - dummy sync flag']
  #allocation13 [shape = 'u32[]', space=smem, size = 0x4, offset = 0x44, fixed_abs, tag = 'smem constant byte address 0x44 - assertion arg 0']
  #allocation14 [shape = 'u32[]', space=smem, size = 0x4, offset = 0x48, fixed_abs, tag = 'smem constant byte address 0x48 - assertion arg 1']
  %s0 = inlined_call_operand.vmem [shape: f32[2], index: 0, kind: input, shape index: {}]
  %s1 = inlined_call_operand.<no memory space> [shape: s32[1], index: 1, kind: input, shape index: {}]
  %s2 = inlined_call_operand.hbm [shape: f32[8,8,8], index: 2, kind: input, shape index: {}]
  %s3 = inlined_call_operand.hbm [shape: bf16[16,64], index: 3, kind: input, shape index: {}]
  %s4 = inlined_call_operand.hbm [shape: f32[4,8,8], index: 4, kind: output, shape index: {}]
  %s5 = sld [smem:[#allocation0]]
  $region34: #{tpu_custom_call.1} parent=0
    _
  %s7 = ssub.s32 1, %s5
  %s8 = scalar_select 0, %s7, %s5
  %9 = sst [smem:[#allocation4]] %s1
  $region1: #{tpu_custom_call.1} parent=0
    #allocation5 [shape = 'u8[512]{0}', space=smem, size = 0x200, scoped, tag = 'input window, operand 0, single buffered']
    #allocation6 [shape = 's32[1]{0}', space=sflag, size = 0x4, scoped, tag = 'scoped memory for tpu_custom_call.1']
    #allocation7 [shape = 's32[1]{0}', space=sflag, size = 0x4, scoped, tag = 'scoped memory for tpu_custom_call.1']
    #allocation8 [shape = 's32[1]{0}', space=sflag, size = 0x4, scoped, tag = 'scoped memory for tpu_custom_call.1']
    #allocation9 [shape = 'u8[32768]{0}', space=vmem, size = 0x8000, scoped, tag = 'input window, operand 2, single buffered']
    #allocation10 [shape = 'u8[16384]{0}', space=vmem, size = 0x4000, scoped, tag = 'output window, operand 0, single buffered']
    %10 = vsyncpa [#allocation8], 0
    %11 = vsyncpa [#allocation6], 0
    %12 = vsyncpa [#allocation7], 0
    // Predicated region
    $region2: #{tpu_custom_call.1} parent=1 // pred_check
      _
    $region3: #{tpu_custom_call.1} parent=1 // pred_check_branch
      %14 = sbr.rel (0) target = $region5
    $region4: #{tpu_custom_call.1} parent=1 // pred_region
      %16 = vsyncadd [#allocation8], 0
      %s18 = sshll.u32 %s0, 4
      %s19 = int_to_ptr.vmem [resolvable:$true] %s18
      %21 = dma.vmem_to_smem %s19, 16, [#allocation5], [#allocation8]
    $region5: #{tpu_custom_call.1} parent=1 // pred_fallthru
      _
    // Predicated region
    $region6: #{tpu_custom_call.1} parent=1 // pred_check
      _
    $region7: #{tpu_custom_call.1} parent=1 // pred_check_branch
      %23 = sbr.rel (0) target = $region9
    $region8: #{tpu_custom_call.1} parent=1 // pred_region
      _
    $region9: #{tpu_custom_call.1} parent=1 // pred_fallthru
      _
    // Predicated region
    $region10: #{tpu_custom_call.1} parent=1 // pred_check
      _
    $region11: #{tpu_custom_call.1} parent=1 // pred_check_branch
      %25 = sbr.rel (0) target = $region13
    $region12: #{tpu_custom_call.1} parent=1 // pred_region
      %27 = vsyncadd [#allocation6], 0
      %s28 = sshll.u32 %s2, 4
      %s29 = int_to_ptr.hbm [resolvable:$true] %s28
      %s30 = sshll.u32 [#allocation9], 4
      %s31 = int_to_ptr.vmem [resolvable:$true] %s30
      %36 = dma.hbm_to_vmem [thread:$0]  %s29, 1024, %s31, [#allocation6], 128, 128, 8
    $region13: #{tpu_custom_call.1} parent=1 // pred_fallthru
      _
    // Predicated region
    $region14: #{tpu_custom_call.1} parent=1 // pred_check
      _
    $region15: #{tpu_custom_call.1} parent=1 // pred_check_branch
      %38 = sbr.rel (0) target = $region17
    $region16: #{tpu_custom_call.1} parent=1 // pred_region
      %40 = dma.done [#allocation8], 16
    $region17: #{tpu_custom_call.1} parent=1 // pred_fallthru
      _
    // Predicated region
    $region18: #{tpu_custom_call.1} parent=1 // pred_check
      _
    $region19: #{tpu_custom_call.1} parent=1 // pred_check_branch
      %42 = sbr.rel (0) target = $region21
    $region20: #{tpu_custom_call.1} parent=1 // pred_region
      %44 = dma.done [#allocation6], 1024
    $region21: #{tpu_custom_call.1} parent=1 // pred_fallthru
      _
    %45 = sfence
    %s47 = sld [smem:[#allocation4]]
    %s48 = sld [smem:[#allocation5]]
    %s49 = sld [smem:[#allocation5 + $0x1]]
    %s50 = sshra.s32 %s47, 3
    %s51 = sand.u32 %s47, 7
    %s52 = smul.addr %s50, 4
    %s53 = scalar_lea.hbm %s3, %s52
    // Predicated region
    $region22: #{tpu_custom_call.1} parent=1 // pred_check
      _
    $region23: #{tpu_custom_call.1} parent=1 // pred_check_branch
      %55 = sbr.rel target = $region25
    $region24: #{tpu_custom_call.1} parent=1 // pred_region
      %56 = sst [smem:[#allocation13]] [#allocation12]
      %57 = sst [smem:[#allocation14]] [#allocation11]
    $region25: #{tpu_custom_call.1} parent=1 // pred_fallthru
      _
    %59 = shalt.err (0)
    %s61 = sshll.u32 %s53, 4
    %s62 = int_to_ptr.hbm [resolvable:$true] %s61
    %s63 = sshll.u32 [#allocation2], 4
    %s64 = int_to_ptr.vmem [resolvable:$true] %s63
    %66 = dma.hbm_to_vmem [thread:$0]  %s62, 128, %s64, [#allocation3]
    %v67 = vld [vmem:[#allocation9] sm:$0xff]
    %v68 = vld [vmem:[#allocation9 + $0x8] sm:$0xff]
    %v69 = vld [vmem:[#allocation9 + $0x10] sm:$0xff]
    %v70 = vld [vmem:[#allocation9 + $0x18] sm:$0xff]
    %v71 = vld [vmem:[#allocation9 + $0x20] sm:$0xff]
    %v72 = vld [vmem:[#allocation9 + $0x28] sm:$0xff]
    %v73 = vld [vmem:[#allocation9 + $0x30] sm:$0xff]
    %v74 = vld [vmem:[#allocation9 + $0x38] sm:$0xff]
    %v75 = vcvt.f32.s32.to.zero.pseudo %v67
    %v76 = vcvt.f32.s32.to.zero.pseudo %v68
    %v77 = vcvt.f32.s32.to.zero.pseudo %v69
    %v78 = vcvt.f32.s32.to.zero.pseudo %v70
    %v79 = vcvt.f32.s32.to.zero.pseudo %v71
    %v80 = vcvt.f32.s32.to.zero.pseudo %v72
    %v81 = vcvt.f32.s32.to.zero.pseudo %v73
    %v82 = vcvt.f32.s32.to.zero.pseudo %v74
    %v83 = vlaneseq
    %v84 = vand.u32 %v83, 127
    %85 = vset.pattern.permute.xlu0 0
    %86 = vperm.xlu0 %85, %v75
    %v87 = vpop.permute.xlu0 %86
    %88 = vset.pattern.permute.xlu0 0
    %89 = vperm.xlu0 %88, %v76
    %v90 = vpop.permute.xlu0 %89
    %91 = vset.pattern.permute.xlu0 0
    %92 = vperm.xlu0 %91, %v77
    %v93 = vpop.permute.xlu0 %92
    %94 = vset.pattern.permute.xlu0 0
    %95 = vperm.xlu0 %94, %v78
    %v96 = vpop.permute.xlu0 %95
    %97 = vset.pattern.permute.xlu0 0
    %98 = vperm.xlu0 %97, %v79
    %v99 = vpop.permute.xlu0 %98
    %100 = vset.pattern.permute.xlu0 0
    %101 = vperm.xlu0 %100, %v80
    %v102 = vpop.permute.xlu0 %101
    %103 = vset.pattern.permute.xlu0 0
    %104 = vperm.xlu0 %103, %v81
    %v105 = vpop.permute.xlu0 %104
    %106 = vset.pattern.permute.xlu0 0
    %107 = vperm.xlu0 %106, %v82
    %v108 = vpop.permute.xlu0 %107
    %vm109 = vcmp.eq.s32.totalorder %v84, %v87
    %vm110 = vcmp.eq.s32.totalorder %v84, %v90
    %vm111 = vcmp.eq.s32.totalorder %v84, %v93
    %vm112 = vcmp.eq.s32.totalorder %v84, %v96
    %vm113 = vcmp.eq.s32.totalorder %v84, %v99
    %vm114 = vcmp.eq.s32.totalorder %v84, %v102
    %vm115 = vcmp.eq.s32.totalorder %v84, %v105
    %vm116 = vcmp.eq.s32.totalorder %v84, %v108
    %118 = vset.pattern.permute.xlu0 4
    %119 = vperm.xlu0 %118, %v67
    %v120 = vpop.permute.xlu0 %119
    %123 = vset.pattern.permute.xlu0 4
    %124 = vperm.xlu0 %123, %v68
    %v125 = vpop.permute.xlu0 %124
    %128 = vset.pattern.permute.xlu0 4
    %129 = vperm.xlu0 %128, %v69
    %v130 = vpop.permute.xlu0 %129
    %133 = vset.pattern.permute.xlu0 4
    %134 = vperm.xlu0 %133, %v70
    %v135 = vpop.permute.xlu0 %134
    %138 = vset.pattern.permute.xlu0 4
    %139 = vperm.xlu0 %138, %v71
    %v140 = vpop.permute.xlu0 %139
    %143 = vset.pattern.permute.xlu0 4
    %144 = vperm.xlu0 %143, %v72
    %v145 = vpop.permute.xlu0 %144
    %148 = vset.pattern.permute.xlu0 4
    %149 = vperm.xlu0 %148, %v73
    %v150 = vpop.permute.xlu0 %149
    %153 = vset.pattern.permute.xlu0 4
    %154 = vperm.xlu0 %153, %v74
    %v155 = vpop.permute.xlu0 %154
    %v157 = vsel %vm109, %v120, 0.0
    %v158 = vsel %vm110, %v125, 0.0
    %v159 = vsel %vm111, %v130, 0.0
    %v160 = vsel %vm112, %v135, 0.0
    %v161 = vsel %vm113, %v140, 0.0
    %v162 = vsel %vm114, %v145, 0.0
    %v163 = vsel %vm115, %v150, 0.0
    %v164 = vsel %vm116, %v155, 0.0
    %165 = vset.pattern.permute.xlu0 1
    %166 = vperm.xlu0 %165, %v75
    %v167 = vpop.permute.xlu0 %166
    %168 = vset.pattern.permute.xlu0 1
    %169 = vperm.xlu0 %168, %v76
    %v170 = vpop.permute.xlu0 %169
    %171 = vset.pattern.permute.xlu0 1
    %172 = vperm.xlu0 %171, %v77
    %v173 = vpop.permute.xlu0 %172
    %174 = vset.pattern.permute.xlu0 1
    %175 = vperm.xlu0 %174, %v78
    %v176 = vpop.permute.xlu0 %175
    %177 = vset.pattern.permute.xlu0 1
    %178 = vperm.xlu0 %177, %v79
    %v179 = vpop.permute.xlu0 %178
    %180 = vset.pattern.permute.xlu0 1
    %181 = vperm.xlu0 %180, %v80
    %v182 = vpop.permute.xlu0 %181
    %183 = vset.pattern.permute.xlu0 1
    %184 = vperm.xlu0 %183, %v81
    %v185 = vpop.permute.xlu0 %184
    %186 = vset.pattern.permute.xlu0 1
    %187 = vperm.xlu0 %186, %v82
    %v188 = vpop.permute.xlu0 %187
    %vm189 = vcmp.eq.s32.totalorder %v84, %v167
    %vm190 = vcmp.eq.s32.totalorder %v84, %v170
    %vm191 = vcmp.eq.s32.totalorder %v84, %v173
    %vm192 = vcmp.eq.s32.totalorder %v84, %v176
    %vm193 = vcmp.eq.s32.totalorder %v84, %v179
    %vm194 = vcmp.eq.s32.totalorder %v84, %v182
    %vm195 = vcmp.eq.s32.totalorder %v84, %v185
    %vm196 = vcmp.eq.s32.totalorder %v84, %v188
    %197 = vset.pattern.permute.xlu0 5
    %198 = vperm.xlu0 %197, %v67
    %v199 = vpop.permute.xlu0 %198
    %201 = vset.pattern.permute.xlu0 5
    %202 = vperm.xlu0 %201, %v68
    %v203 = vpop.permute.xlu0 %202
    %205 = vset.pattern.permute.xlu0 5
    %206 = vperm.xlu0 %205, %v69
    %v207 = vpop.permute.xlu0 %206
    %209 = vset.pattern.permute.xlu0 5
    %210 = vperm.xlu0 %209, %v70
    %v211 = vpop.permute.xlu0 %210
    %213 = vset.pattern.permute.xlu0 5
    %214 = vperm.xlu0 %213, %v71
    %v215 = vpop.permute.xlu0 %214
    %217 = vset.pattern.permute.xlu0 5
    %218 = vperm.xlu0 %217, %v72
    %v219 = vpop.permute.xlu0 %218
    %221 = vset.pattern.permute.xlu0 5
    %222 = vperm.xlu0 %221, %v73
    %v223 = vpop.permute.xlu0 %222
    %225 = vset.pattern.permute.xlu0 5
    %226 = vperm.xlu0 %225, %v74
    %v227 = vpop.permute.xlu0 %226
    %v229 = vsel %vm189, %v199, 0.0
    %v230 = vsel %vm190, %v203, 0.0
    %v231 = vsel %vm191, %v207, 0.0
    %v232 = vsel %vm192, %v211, 0.0
    %v233 = vsel %vm193, %v215, 0.0
    %v234 = vsel %vm194, %v219, 0.0
    %v235 = vsel %vm195, %v223, 0.0
    %v236 = vsel %vm196, %v227, 0.0
    %v237 = vadd.f32 %v157, %v229
    %v238 = vadd.f32 %v158, %v230
    %v239 = vadd.f32 %v159, %v231
    %v240 = vadd.f32 %v160, %v232
    %v241 = vadd.f32 %v161, %v233
    %v242 = vadd.f32 %v162, %v234
    %v243 = vadd.f32 %v163, %v235
    %v244 = vadd.f32 %v164, %v236
    %245 = vset.pattern.permute.xlu0 2
    %246 = vperm.xlu0 %245, %v75
    %v247 = vpop.permute.xlu0 %246
    %248 = vset.pattern.permute.xlu0 2
    %249 = vperm.xlu0 %248, %v76
    %v250 = vpop.permute.xlu0 %249
    %251 = vset.pattern.permute.xlu0 2
    %252 = vperm.xlu0 %251, %v77
    %v253 = vpop.permute.xlu0 %252
    %254 = vset.pattern.permute.xlu0 2
    %255 = vperm.xlu0 %254, %v78
    %v256 = vpop.permute.xlu0 %255
    %257 = vset.pattern.permute.xlu0 2
    %258 = vperm.xlu0 %257, %v79
    %v259 = vpop.permute.xlu0 %258
    %260 = vset.pattern.permute.xlu0 2
    %261 = vperm.xlu0 %260, %v80
    %v262 = vpop.permute.xlu0 %261
    %263 = vset.pattern.permute.xlu0 2
    %264 = vperm.xlu0 %263, %v81
    %v265 = vpop.permute.xlu0 %264
    %266 = vset.pattern.permute.xlu0 2
    %267 = vperm.xlu0 %266, %v82
    %v268 = vpop.permute.xlu0 %267
    %vm269 = vcmp.eq.s32.totalorder %v84, %v247
    %vm270 = vcmp.eq.s32.totalorder %v84, %v250
    %vm271 = vcmp.eq.s32.totalorder %v84, %v253
    %vm272 = vcmp.eq.s32.totalorder %v84, %v256
    %vm273 = vcmp.eq.s32.totalorder %v84, %v259
    %vm274 = vcmp.eq.s32.totalorder %v84, %v262
    %vm275 = vcmp.eq.s32.totalorder %v84, %v265
    %vm276 = vcmp.eq.s32.totalorder %v84, %v268
    %277 = vset.pattern.permute.xlu0 6
    %278 = vperm.xlu0 %277, %v67
    %v279 = vpop.permute.xlu0 %278
    %281 = vset.pattern.permute.xlu0 6
    %282 = vperm.xlu0 %281, %v68
    %v283 = vpop.permute.xlu0 %282
    %285 = vset.pattern.permute.xlu0 6
    %286 = vperm.xlu0 %285, %v69
    %v287 = vpop.permute.xlu0 %286
    %289 = vset.pattern.permute.xlu0 6
    %290 = vperm.xlu0 %289, %v70
    %v291 = vpop.permute.xlu0 %290
    %293 = vset.pattern.permute.xlu0 6
    %294 = vperm.xlu0 %293, %v71
    %v295 = vpop.permute.xlu0 %294
    %297 = vset.pattern.permute.xlu0 6
    %298 = vperm.xlu0 %297, %v72
    %v299 = vpop.permute.xlu0 %298
    %301 = vset.pattern.permute.xlu0 6
    %302 = vperm.xlu0 %301, %v73
    %v303 = vpop.permute.xlu0 %302
    %305 = vset.pattern.permute.xlu0 6
    %306 = vperm.xlu0 %305, %v74
    %v307 = vpop.permute.xlu0 %306
    %v309 = vsel %vm269, %v279, 0.0
    %v310 = vsel %vm270, %v283, 0.0
    %v311 = vsel %vm271, %v287, 0.0
    %v312 = vsel %vm272, %v291, 0.0
    %v313 = vsel %vm273, %v295, 0.0
    %v314 = vsel %vm274, %v299, 0.0
    %v315 = vsel %vm275, %v303, 0.0
    %v316 = vsel %vm276, %v307, 0.0
    %317 = vset.pattern.permute.xlu0 3
    %318 = vperm.xlu0 %317, %v75
    %v319 = vpop.permute.xlu0 %318
    %320 = vset.pattern.permute.xlu0 3
    %321 = vperm.xlu0 %320, %v76
    %v322 = vpop.permute.xlu0 %321
    %323 = vset.pattern.permute.xlu0 3
    %324 = vperm.xlu0 %323, %v77
    %v325 = vpop.permute.xlu0 %324
    %326 = vset.pattern.permute.xlu0 3
    %327 = vperm.xlu0 %326, %v78
    %v328 = vpop.permute.xlu0 %327
    %329 = vset.pattern.permute.xlu0 3
    %330 = vperm.xlu0 %329, %v79
    %v331 = vpop.permute.xlu0 %330
    %332 = vset.pattern.permute.xlu0 3
    %333 = vperm.xlu0 %332, %v80
    %v334 = vpop.permute.xlu0 %333
    %335 = vset.pattern.permute.xlu0 3
    %336 = vperm.xlu0 %335, %v81
    %v337 = vpop.permute.xlu0 %336
    %338 = vset.pattern.permute.xlu0 3
    %339 = vperm.xlu0 %338, %v82
    %v340 = vpop.permute.xlu0 %339
    %vm341 = vcmp.eq.s32.totalorder %v84, %v319
    %vm342 = vcmp.eq.s32.totalorder %v84, %v322
    %vm343 = vcmp.eq.s32.totalorder %v84, %v325
    %vm344 = vcmp.eq.s32.totalorder %v84, %v328
    %vm345 = vcmp.eq.s32.totalorder %v84, %v331
    %vm346 = vcmp.eq.s32.totalorder %v84, %v334
    %vm347 = vcmp.eq.s32.totalorder %v84, %v337
    %vm348 = vcmp.eq.s32.totalorder %v84, %v340
    %349 = vset.pattern.permute.xlu0 7
    %350 = vperm.xlu0 %349, %v67
    %v351 = vpop.permute.xlu0 %350
    %353 = vset.pattern.permute.xlu0 7
    %354 = vperm.xlu0 %353, %v68
    %v355 = vpop.permute.xlu0 %354
    %357 = vset.pattern.permute.xlu0 7
    %358 = vperm.xlu0 %357, %v69
    %v359 = vpop.permute.xlu0 %358
    %361 = vset.pattern.permute.xlu0 7
    %362 = vperm.xlu0 %361, %v70
    %v363 = vpop.permute.xlu0 %362
    %365 = vset.pattern.permute.xlu0 7
    %366 = vperm.xlu0 %365, %v71
    %v367 = vpop.permute.xlu0 %366
    %369 = vset.pattern.permute.xlu0 7
    %370 = vperm.xlu0 %369, %v72
    %v371 = vpop.permute.xlu0 %370
    %373 = vset.pattern.permute.xlu0 7
    %374 = vperm.xlu0 %373, %v73
    %v375 = vpop.permute.xlu0 %374
    %377 = vset.pattern.permute.xlu0 7
    %378 = vperm.xlu0 %377, %v74
    %v379 = vpop.permute.xlu0 %378
    %v381 = vsel %vm341, %v351, 0.0
    %v382 = vsel %vm342, %v355, 0.0
    %v383 = vsel %vm343, %v359, 0.0
    %v384 = vsel %vm344, %v363, 0.0
    %v385 = vsel %vm345, %v367, 0.0
    %v386 = vsel %vm346, %v371, 0.0
    %v387 = vsel %vm347, %v375, 0.0
    %v388 = vsel %vm348, %v379, 0.0
    %v389 = vadd.f32 %v309, %v381
    %v390 = vadd.f32 %v310, %v382
    %v391 = vadd.f32 %v311, %v383
    %v392 = vadd.f32 %v312, %v384
    %v393 = vadd.f32 %v313, %v385
    %v394 = vadd.f32 %v314, %v386
    %v395 = vadd.f32 %v315, %v387
    %v396 = vadd.f32 %v316, %v388
    %s397 = smul.u32 4, 2
    %s398 = smul.u32 %s397, 1
    %s399 = sshll.u32 %s398, 4
    %400 = dma.done [#allocation3], %s399
    %v401 = vpack.c.bf16 %v238, %v237
    %v402 = vpack.c.bf16 %v240, %v239
    %v403 = vpack.c.bf16 %v242, %v241
    %v404 = vpack.c.bf16 %v244, %v243
    %v405 = vld [vmem:[#allocation2] sm:$0xf]
    %v406 = vld [vmem:[#allocation2 + $0x4] sm:$0xf]
    %v409 = vunpack.c.l.b16 %v405
    %v410 = vunpack.c.l.b16 %v406
    %v411 = vpack.c.b16 %v410, %v409
    %vm413 = vcmask 130048
    %v415 = vsel %vm413, %v401, 0
    %v418 = vsel %vm413, %v402, 0
    %v421 = vsel %vm413, %v403, 0
    %v424 = vsel %vm413, %v404, 0
    %426 = vmatpush.bf16.msra.mxu0 0
    %427 = vmatpush.bf16.msra.mxu0 0
    %428 = vmatpush.bf16.msra.mxu0 0
    %429 = vmatpush.bf16.msra.mxu0 0
    %430 = vmatpush.bf16.msra.mxu0 0
    %431 = vmatpush.bf16.msra.mxu0 0
    %432 = vmatpush.bf16.msra.mxu0 0
    %433 = vmatpush.bf16.msra.mxu0 %v411
    %434 = vmatmul.bf16.gmra.mxu0 %v415
    %v435 = vpop.f32.mrf.mxu0
    %v436 = vadd.f32 0.0, %v435
    %v437 = vpop.f32.mrf.mxu0
    %v438 = vadd.f32 0.0, %v437
    %439 = vmatmul.bf16.gmra.mxu0 %v418
    %v440 = vpop.f32.mrf.mxu0
    %v441 = vadd.f32 0.0, %v440
    %v442 = vpop.f32.mrf.mxu0
    %v443 = vadd.f32 0.0, %v442
    %444 = vmatmul.bf16.gmra.mxu0 %v421
    %v445 = vpop.f32.mrf.mxu0
    %v446 = vadd.f32 0.0, %v445
    %v447 = vpop.f32.mrf.mxu0
    %v448 = vadd.f32 0.0, %v447
    %449 = vmatmul.bf16.gmra.mxu0 %v424
    %v450 = vpop.f32.mrf.mxu0
    %v451 = vadd.f32 0.0, %v450
    %v452 = vpop.f32.mrf.mxu0
    %v453 = vadd.f32 0.0, %v452
    %454 = vdwg.mxu0
    %463 = vrot.lane.b32.xlu0 %v436, 112
    %v464 = vpop.permute.xlu0 %463
    %465 = vrot.lane.b32.xlu0 %v438, 112
    %v466 = vpop.permute.xlu0 %465
    %467 = vrot.lane.b32.xlu0 %v441, 112
    %v468 = vpop.permute.xlu0 %467
    %469 = vrot.lane.b32.xlu0 %v443, 112
    %v470 = vpop.permute.xlu0 %469
    %471 = vrot.lane.b32.xlu0 %v446, 112
    %v472 = vpop.permute.xlu0 %471
    %473 = vrot.lane.b32.xlu0 %v448, 112
    %v474 = vpop.permute.xlu0 %473
    %475 = vrot.lane.b32.xlu0 %v451, 112
    %v476 = vpop.permute.xlu0 %475
    %477 = vrot.lane.b32.xlu0 %v453, 112
    %v478 = vpop.permute.xlu0 %477
    %487 = vrot.lane.b32.xlu0 %v436, 96
    %v488 = vpop.permute.xlu0 %487
    %489 = vrot.lane.b32.xlu0 %v438, 96
    %v490 = vpop.permute.xlu0 %489
    %491 = vrot.lane.b32.xlu0 %v441, 96
    %v492 = vpop.permute.xlu0 %491
    %493 = vrot.lane.b32.xlu0 %v443, 96
    %v494 = vpop.permute.xlu0 %493
    %495 = vrot.lane.b32.xlu0 %v446, 96
    %v496 = vpop.permute.xlu0 %495
    %497 = vrot.lane.b32.xlu0 %v448, 96
    %v498 = vpop.permute.xlu0 %497
    %499 = vrot.lane.b32.xlu0 %v451, 96
    %v500 = vpop.permute.xlu0 %499
    %501 = vrot.lane.b32.xlu0 %v453, 96
    %v502 = vpop.permute.xlu0 %501
    %511 = vrot.lane.b32.xlu0 %v436, 80
    %v512 = vpop.permute.xlu0 %511
    %513 = vrot.lane.b32.xlu0 %v438, 80
    %v514 = vpop.permute.xlu0 %513
    %515 = vrot.lane.b32.xlu0 %v441, 80
    %v516 = vpop.permute.xlu0 %515
    %517 = vrot.lane.b32.xlu0 %v443, 80
    %v518 = vpop.permute.xlu0 %517
    %519 = vrot.lane.b32.xlu0 %v446, 80
    %v520 = vpop.permute.xlu0 %519
    %521 = vrot.lane.b32.xlu0 %v448, 80
    %v522 = vpop.permute.xlu0 %521
    %523 = vrot.lane.b32.xlu0 %v451, 80
    %v524 = vpop.permute.xlu0 %523
    %525 = vrot.lane.b32.xlu0 %v453, 80
    %v526 = vpop.permute.xlu0 %525
    %v535 = vrot.slane %v488, 4
    %vm536 = vcmask 1047556
    %v537 = vsel %vm536, %v535, %v436
    %v538 = vrot.slane %v436, 4
    %v539 = vsel %vm536, %v488, %v538
    %v541 = vunpack.c.l.s4 1983009808
    %v542 = vunpack.c.0.s8 %v541
    %v543 = vperm.slane %v537, %v542
    %v545 = vunpack.c.l.s4 1983009808
    %v546 = vunpack.c.0.s8 %v545
    %v547 = vperm.slane %v539, %v546
    %v548 = vrot.slane %v512, 4
    %v549 = vsel %vm536, %v548, %v464
    %v550 = vrot.slane %v464, 4
    %v551 = vsel %vm536, %v512, %v550
    %v553 = vunpack.c.l.s4 1983009808
    %v554 = vunpack.c.0.s8 %v553
    %v555 = vperm.slane %v549, %v554
    %v557 = vunpack.c.l.s4 1983009808
    %v558 = vunpack.c.0.s8 %v557
    %v559 = vperm.slane %v551, %v558
    %v560 = vrot.slane %v555, 4
    %v561 = vsel %vm536, %v560, %v543
    %v562 = vrot.slane %v543, 4
    %v563 = vsel %vm536, %v555, %v562
    %v565 = vunpack.c.l.s4 1934713408
    %v566 = vunpack.c.0.s8 %v565
    %v567 = vperm.slane %v561, %v566
    %v569 = vunpack.c.l.s4 1934713408
    %v570 = vunpack.c.0.s8 %v569
    %v571 = vperm.slane %v563, %v570
    %v572 = vrot.slane %v559, 4
    %v573 = vsel %vm536, %v572, %v547
    %v574 = vrot.slane %v547, 4
    %v575 = vsel %vm536, %v559, %v574
    %v577 = vunpack.c.l.s4 1934713408
    %v578 = vunpack.c.0.s8 %v577
    %v579 = vperm.slane %v573, %v578
    %v581 = vunpack.c.l.s4 1934713408
    %v582 = vunpack.c.0.s8 %v581
    %v583 = vperm.slane %v575, %v582
    %v584 = vrot.slane %v567, 4
    %v585 = vsel %vm536, 0.0, %v584
    %v586 = vrot.slane %v571, 4
    %v587 = vsel %vm536, 0.0, %v586
    %v588 = vrot.slane %v579, 4
    %v589 = vsel %vm536, 0.0, %v588
    %v590 = vrot.slane %v583, 4
    %v591 = vsel %vm536, 0.0, %v590
    %v592 = vrot.slane %v490, 4
    %v593 = vsel %vm536, %v592, %v438
    %v594 = vrot.slane %v438, 4
    %v595 = vsel %vm536, %v490, %v594
    %v597 = vunpack.c.l.s4 1983009808
    %v598 = vunpack.c.0.s8 %v597
    %v599 = vperm.slane %v593, %v598
    %v601 = vunpack.c.l.s4 1983009808
    %v602 = vunpack.c.0.s8 %v601
    %v603 = vperm.slane %v595, %v602
    %v604 = vrot.slane %v514, 4
    %v605 = vsel %vm536, %v604, %v466
    %v606 = vrot.slane %v466, 4
    %v607 = vsel %vm536, %v514, %v606
    %v609 = vunpack.c.l.s4 1983009808
    %v610 = vunpack.c.0.s8 %v609
    %v611 = vperm.slane %v605, %v610
    %v613 = vunpack.c.l.s4 1983009808
    %v614 = vunpack.c.0.s8 %v613
    %v615 = vperm.slane %v607, %v614
    %v616 = vrot.slane %v611, 4
    %v617 = vsel %vm536, %v616, %v599
    %v618 = vrot.slane %v599, 4
    %v619 = vsel %vm536, %v611, %v618
    %v621 = vunpack.c.l.s4 1934713408
    %v622 = vunpack.c.0.s8 %v621
    %v623 = vperm.slane %v617, %v622
    %v625 = vunpack.c.l.s4 1934713408
    %v626 = vunpack.c.0.s8 %v625
    %v627 = vperm.slane %v619, %v626
    %v628 = vrot.slane %v615, 4
    %v629 = vsel %vm536, %v628, %v603
    %v630 = vrot.slane %v603, 4
    %v631 = vsel %vm536, %v615, %v630
    %v633 = vunpack.c.l.s4 1934713408
    %v634 = vunpack.c.0.s8 %v633
    %v635 = vperm.slane %v629, %v634
    %v637 = vunpack.c.l.s4 1934713408
    %v638 = vunpack.c.0.s8 %v637
    %v639 = vperm.slane %v631, %v638
    %v640 = vrot.slane %v623, 4
    %v641 = vsel %vm536, 0.0, %v640
    %v642 = vrot.slane %v627, 4
    %v643 = vsel %vm536, 0.0, %v642
    %v644 = vrot.slane %v635, 4
    %v645 = vsel %vm536, 0.0, %v644
    %v646 = vrot.slane %v639, 4
    %v647 = vsel %vm536, 0.0, %v646
    %v648 = vrot.slane %v492, 4
    %v649 = vsel %vm536, %v648, %v441
    %v650 = vrot.slane %v441, 4
    %v651 = vsel %vm536, %v492, %v650
    %v653 = vunpack.c.l.s4 1983009808
    %v654 = vunpack.c.0.s8 %v653
    %v655 = vperm.slane %v649, %v654
    %v657 = vunpack.c.l.s4 1983009808
    %v658 = vunpack.c.0.s8 %v657
    %v659 = vperm.slane %v651, %v658
    %v660 = vrot.slane %v516, 4
    %v661 = vsel %vm536, %v660, %v468
    %v662 = vrot.slane %v468, 4
    %v663 = vsel %vm536, %v516, %v662
    %v665 = vunpack.c.l.s4 1983009808
    %v666 = vunpack.c.0.s8 %v665
    %v667 = vperm.slane %v661, %v666
    %v669 = vunpack.c.l.s4 1983009808
    %v670 = vunpack.c.0.s8 %v669
    %v671 = vperm.slane %v663, %v670
    %v672 = vrot.slane %v667, 4
    %v673 = vsel %vm536, %v672, %v655
    %v674 = vrot.slane %v655, 4
    %v675 = vsel %vm536, %v667, %v674
    %v677 = vunpack.c.l.s4 1934713408
    %v678 = vunpack.c.0.s8 %v677
    %v679 = vperm.slane %v673, %v678
    %v681 = vunpack.c.l.s4 1934713408
    %v682 = vunpack.c.0.s8 %v681
    %v683 = vperm.slane %v675, %v682
    %v684 = vrot.slane %v671, 4
    %v685 = vsel %vm536, %v684, %v659
    %v686 = vrot.slane %v659, 4
    %v687 = vsel %vm536, %v671, %v686
    %v689 = vunpack.c.l.s4 1934713408
    %v690 = vunpack.c.0.s8 %v689
    %v691 = vperm.slane %v685, %v690
    %v693 = vunpack.c.l.s4 1934713408
    %v694 = vunpack.c.0.s8 %v693
    %v695 = vperm.slane %v687, %v694
    %v696 = vrot.slane %v679, 4
    %v697 = vsel %vm536, 0.0, %v696
    %v698 = vrot.slane %v683, 4
    %v699 = vsel %vm536, 0.0, %v698
    %v700 = vrot.slane %v691, 4
    %v701 = vsel %vm536, 0.0, %v700
    %v702 = vrot.slane %v695, 4
    %v703 = vsel %vm536, 0.0, %v702
    %v704 = vrot.slane %v494, 4
    %v705 = vsel %vm536, %v704, %v443
    %v706 = vrot.slane %v443, 4
    %v707 = vsel %vm536, %v494, %v706
    %v709 = vunpack.c.l.s4 1983009808
    %v710 = vunpack.c.0.s8 %v709
    %v711 = vperm.slane %v705, %v710
    %v713 = vunpack.c.l.s4 1983009808
    %v714 = vunpack.c.0.s8 %v713
    %v715 = vperm.slane %v707, %v714
    %v716 = vrot.slane %v518, 4
    %v717 = vsel %vm536, %v716, %v470
    %v718 = vrot.slane %v470, 4
    %v719 = vsel %vm536, %v518, %v718
    %v721 = vunpack.c.l.s4 1983009808
    %v722 = vunpack.c.0.s8 %v721
    %v723 = vperm.slane %v717, %v722
    %v725 = vunpack.c.l.s4 1983009808
    %v726 = vunpack.c.0.s8 %v725
    %v727 = vperm.slane %v719, %v726
    %v728 = vrot.slane %v723, 4
    %v729 = vsel %vm536, %v728, %v711
    %v730 = vrot.slane %v711, 4
    %v731 = vsel %vm536, %v723, %v730
    %v733 = vunpack.c.l.s4 1934713408
    %v734 = vunpack.c.0.s8 %v733
    %v735 = vperm.slane %v729, %v734
    %v737 = vunpack.c.l.s4 1934713408
    %v738 = vunpack.c.0.s8 %v737
    %v739 = vperm.slane %v731, %v738
    %v740 = vrot.slane %v727, 4
    %v741 = vsel %vm536, %v740, %v715
    %v742 = vrot.slane %v715, 4
    %v743 = vsel %vm536, %v727, %v742
    %v745 = vunpack.c.l.s4 1934713408
    %v746 = vunpack.c.0.s8 %v745
    %v747 = vperm.slane %v741, %v746
    %v749 = vunpack.c.l.s4 1934713408
    %v750 = vunpack.c.0.s8 %v749
    %v751 = vperm.slane %v743, %v750
    %v752 = vrot.slane %v735, 4
    %v753 = vsel %vm536, 0.0, %v752
    %v754 = vrot.slane %v739, 4
    %v755 = vsel %vm536, 0.0, %v754
    %v756 = vrot.slane %v747, 4
    %v757 = vsel %vm536, 0.0, %v756
    %v758 = vrot.slane %v751, 4
    %v759 = vsel %vm536, 0.0, %v758
    %v760 = vrot.slane %v496, 4
    %v761 = vsel %vm536, %v760, %v446
    %v762 = vrot.slane %v446, 4
    %v763 = vsel %vm536, %v496, %v762
    %v765 = vunpack.c.l.s4 1983009808
    %v766 = vunpack.c.0.s8 %v765
    %v767 = vperm.slane %v761, %v766
    %v769 = vunpack.c.l.s4 1983009808
    %v770 = vunpack.c.0.s8 %v769
    %v771 = vperm.slane %v763, %v770
    %v772 = vrot.slane %v520, 4
    %v773 = vsel %vm536, %v772, %v472
    %v774 = vrot.slane %v472, 4
    %v775 = vsel %vm536, %v520, %v774
    %v777 = vunpack.c.l.s4 1983009808
    %v778 = vunpack.c.0.s8 %v777
    %v779 = vperm.slane %v773, %v778
    %v781 = vunpack.c.l.s4 1983009808
    %v782 = vunpack.c.0.s8 %v781
    %v783 = vperm.slane %v775, %v782
    %v784 = vrot.slane %v779, 4
    %v785 = vsel %vm536, %v784, %v767
    %v786 = vrot.slane %v767, 4
    %v787 = vsel %vm536, %v779, %v786
    %v789 = vunpack.c.l.s4 1934713408
    %v790 = vunpack.c.0.s8 %v789
    %v791 = vperm.slane %v785, %v790
    %v793 = vunpack.c.l.s4 1934713408
    %v794 = vunpack.c.0.s8 %v793
    %v795 = vperm.slane %v787, %v794
    %v796 = vrot.slane %v783, 4
    %v797 = vsel %vm536, %v796, %v771
    %v798 = vrot.slane %v771, 4
    %v799 = vsel %vm536, %v783, %v798
    %v801 = vunpack.c.l.s4 1934713408
    %v802 = vunpack.c.0.s8 %v801
    %v803 = vperm.slane %v797, %v802
    %v805 = vunpack.c.l.s4 1934713408
    %v806 = vunpack.c.0.s8 %v805
    %v807 = vperm.slane %v799, %v806
    %v808 = vrot.slane %v791, 4
    %v809 = vsel %vm536, 0.0, %v808
    %v810 = vrot.slane %v795, 4
    %v811 = vsel %vm536, 0.0, %v810
    %v812 = vrot.slane %v803, 4
    %v813 = vsel %vm536, 0.0, %v812
    %v814 = vrot.slane %v807, 4
    %v815 = vsel %vm536, 0.0, %v814
    %v816 = vrot.slane %v498, 4
    %v817 = vsel %vm536, %v816, %v448
    %v818 = vrot.slane %v448, 4
    %v819 = vsel %vm536, %v498, %v818
    %v821 = vunpack.c.l.s4 1983009808
    %v822 = vunpack.c.0.s8 %v821
    %v823 = vperm.slane %v817, %v822
    %v825 = vunpack.c.l.s4 1983009808
    %v826 = vunpack.c.0.s8 %v825
    %v827 = vperm.slane %v819, %v826
    %v828 = vrot.slane %v522, 4
    %v829 = vsel %vm536, %v828, %v474
    %v830 = vrot.slane %v474, 4
    %v831 = vsel %vm536, %v522, %v830
    %v833 = vunpack.c.l.s4 1983009808
    %v834 = vunpack.c.0.s8 %v833
    %v835 = vperm.slane %v829, %v834
    %v837 = vunpack.c.l.s4 1983009808
    %v838 = vunpack.c.0.s8 %v837
    %v839 = vperm.slane %v831, %v838
    %v840 = vrot.slane %v835, 4
    %v841 = vsel %vm536, %v840, %v823
    %v842 = vrot.slane %v823, 4
    %v843 = vsel %vm536, %v835, %v842
    %v845 = vunpack.c.l.s4 1934713408
    %v846 = vunpack.c.0.s8 %v845
    %v847 = vperm.slane %v841, %v846
    %v849 = vunpack.c.l.s4 1934713408
    %v850 = vunpack.c.0.s8 %v849
    %v851 = vperm.slane %v843, %v850
    %v852 = vrot.slane %v839, 4
    %v853 = vsel %vm536, %v852, %v827
    %v854 = vrot.slane %v827, 4
    %v855 = vsel %vm536, %v839, %v854
    %v857 = vunpack.c.l.s4 1934713408
    %v858 = vunpack.c.0.s8 %v857
    %v859 = vperm.slane %v853, %v858
    %v861 = vunpack.c.l.s4 1934713408
    %v862 = vunpack.c.0.s8 %v861
    %v863 = vperm.slane %v855, %v862
    %v864 = vrot.slane %v847, 4
    %v865 = vsel %vm536, 0.0, %v864
    %v866 = vrot.slane %v851, 4
    %v867 = vsel %vm536, 0.0, %v866
    %v868 = vrot.slane %v859, 4
    %v869 = vsel %vm536, 0.0, %v868
    %v870 = vrot.slane %v863, 4
    %v871 = vsel %vm536, 0.0, %v870
    %v872 = vrot.slane %v500, 4
    %v873 = vsel %vm536, %v872, %v451
    %v874 = vrot.slane %v451, 4
    %v875 = vsel %vm536, %v500, %v874
    %v877 = vunpack.c.l.s4 1983009808
    %v878 = vunpack.c.0.s8 %v877
    %v879 = vperm.slane %v873, %v878
    %v881 = vunpack.c.l.s4 1983009808
    %v882 = vunpack.c.0.s8 %v881
    %v883 = vperm.slane %v875, %v882
    %v884 = vrot.slane %v524, 4
    %v885 = vsel %vm536, %v884, %v476
    %v886 = vrot.slane %v476, 4
    %v887 = vsel %vm536, %v524, %v886
    %v889 = vunpack.c.l.s4 1983009808
    %v890 = vunpack.c.0.s8 %v889
    %v891 = vperm.slane %v885, %v890
    %v893 = vunpack.c.l.s4 1983009808
    %v894 = vunpack.c.0.s8 %v893
    %v895 = vperm.slane %v887, %v894
    %v896 = vrot.slane %v891, 4
    %v897 = vsel %vm536, %v896, %v879
    %v898 = vrot.slane %v879, 4
    %v899 = vsel %vm536, %v891, %v898
    %v901 = vunpack.c.l.s4 1934713408
    %v902 = vunpack.c.0.s8 %v901
    %v903 = vperm.slane %v897, %v902
    %v905 = vunpack.c.l.s4 1934713408
    %v906 = vunpack.c.0.s8 %v905
    %v907 = vperm.slane %v899, %v906
    %v908 = vrot.slane %v895, 4
    %v909 = vsel %vm536, %v908, %v883
    %v910 = vrot.slane %v883, 4
    %v911 = vsel %vm536, %v895, %v910
    %v913 = vunpack.c.l.s4 1934713408
    %v914 = vunpack.c.0.s8 %v913
    %v915 = vperm.slane %v909, %v914
    %v917 = vunpack.c.l.s4 1934713408
    %v918 = vunpack.c.0.s8 %v917
    %v919 = vperm.slane %v911, %v918
    %v920 = vrot.slane %v903, 4
    %v921 = vsel %vm536, 0.0, %v920
    %v922 = vrot.slane %v907, 4
    %v923 = vsel %vm536, 0.0, %v922
    %v924 = vrot.slane %v915, 4
    %v925 = vsel %vm536, 0.0, %v924
    %v926 = vrot.slane %v919, 4
    %v927 = vsel %vm536, 0.0, %v926
    %v928 = vrot.slane %v502, 4
    %v929 = vsel %vm536, %v928, %v453
    %v930 = vrot.slane %v453, 4
    %v931 = vsel %vm536, %v502, %v930
    %v933 = vunpack.c.l.s4 1983009808
    %v934 = vunpack.c.0.s8 %v933
    %v935 = vperm.slane %v929, %v934
    %v937 = vunpack.c.l.s4 1983009808
    %v938 = vunpack.c.0.s8 %v937
    %v939 = vperm.slane %v931, %v938
    %v940 = vrot.slane %v526, 4
    %v941 = vsel %vm536, %v940, %v478
    %v942 = vrot.slane %v478, 4
    %v943 = vsel %vm536, %v526, %v942
    %v945 = vunpack.c.l.s4 1983009808
    %v946 = vunpack.c.0.s8 %v945
    %v947 = vperm.slane %v941, %v946
    %v949 = vunpack.c.l.s4 1983009808
    %v950 = vunpack.c.0.s8 %v949
    %v951 = vperm.slane %v943, %v950
    %v952 = vrot.slane %v947, 4
    %v953 = vsel %vm536, %v952, %v935
    %v954 = vrot.slane %v935, 4
    %v955 = vsel %vm536, %v947, %v954
    %v957 = vunpack.c.l.s4 1934713408
    %v958 = vunpack.c.0.s8 %v957
    %v959 = vperm.slane %v953, %v958
    %v961 = vunpack.c.l.s4 1934713408
    %v962 = vunpack.c.0.s8 %v961
    %v963 = vperm.slane %v955, %v962
    %v964 = vrot.slane %v951, 4
    %v965 = vsel %vm536, %v964, %v939
    %v966 = vrot.slane %v939, 4
    %v967 = vsel %vm536, %v951, %v966
    %v969 = vunpack.c.l.s4 1934713408
    %v970 = vunpack.c.0.s8 %v969
    %v971 = vperm.slane %v965, %v970
    %v973 = vunpack.c.l.s4 1934713408
    %v974 = vunpack.c.0.s8 %v973
    %v975 = vperm.slane %v967, %v974
    %v976 = vrot.slane %v959, 4
    %v977 = vsel %vm536, 0.0, %v976
    %v978 = vrot.slane %v963, 4
    %v979 = vsel %vm536, 0.0, %v978
    %v980 = vrot.slane %v971, 4
    %v981 = vsel %vm536, 0.0, %v980
    %v982 = vrot.slane %v975, 4
    %v983 = vsel %vm536, 0.0, %v982
    %v992 = vrot.slane %v389, 1
    %v993 = vrot.slane %v389, 2
    %v994 = vrot.slane %v389, 3
    %v995 = vrot.slane %v389, 4
    %v996 = vrot.slane %v389, 5
    %v997 = vrot.slane %v389, 6
    %v998 = vrot.slane %v389, 7
    %v999 = vrot.slane %v390, 1
    %v1000 = vrot.slane %v390, 2
    %v1001 = vrot.slane %v390, 3
    %v1002 = vrot.slane %v390, 4
    %v1003 = vrot.slane %v390, 5
    %v1004 = vrot.slane %v390, 6
    %v1005 = vrot.slane %v390, 7
    %v1006 = vrot.slane %v391, 1
    %v1007 = vrot.slane %v391, 2
    %v1008 = vrot.slane %v391, 3
    %v1009 = vrot.slane %v391, 4
    %v1010 = vrot.slane %v391, 5
    %v1011 = vrot.slane %v391, 6
    %v1012 = vrot.slane %v391, 7
    %v1013 = vrot.slane %v392, 1
    %v1014 = vrot.slane %v392, 2
    %v1015 = vrot.slane %v392, 3
    %v1016 = vrot.slane %v392, 4
    %v1017 = vrot.slane %v392, 5
    %v1018 = vrot.slane %v392, 6
    %v1019 = vrot.slane %v392, 7
    %v1020 = vrot.slane %v393, 1
    %v1021 = vrot.slane %v393, 2
    %v1022 = vrot.slane %v393, 3
    %v1023 = vrot.slane %v393, 4
    %v1024 = vrot.slane %v393, 5
    %v1025 = vrot.slane %v393, 6
    %v1026 = vrot.slane %v393, 7
    %v1027 = vrot.slane %v394, 1
    %v1028 = vrot.slane %v394, 2
    %v1029 = vrot.slane %v394, 3
    %v1030 = vrot.slane %v394, 4
    %v1031 = vrot.slane %v394, 5
    %v1032 = vrot.slane %v394, 6
    %v1033 = vrot.slane %v394, 7
    %v1034 = vrot.slane %v395, 1
    %v1035 = vrot.slane %v395, 2
    %v1036 = vrot.slane %v395, 3
    %v1037 = vrot.slane %v395, 4
    %v1038 = vrot.slane %v395, 5
    %v1039 = vrot.slane %v395, 6
    %v1040 = vrot.slane %v395, 7
    %v1041 = vrot.slane %v396, 1
    %v1042 = vrot.slane %v396, 2
    %v1043 = vrot.slane %v396, 3
    %v1044 = vrot.slane %v396, 4
    %v1045 = vrot.slane %v396, 5
    %v1046 = vrot.slane %v396, 6
    %v1047 = vrot.slane %v396, 7
    %v1048 = vperm.slane %v389, 0
    %v1049 = vperm.slane %v992, 0
    %v1050 = vperm.slane %v993, 0
    %v1051 = vperm.slane %v994, 0
    %v1052 = vperm.slane %v995, 0
    %v1053 = vperm.slane %v996, 0
    %v1054 = vperm.slane %v997, 0
    %v1055 = vperm.slane %v998, 0
    %v1056 = vperm.slane %v390, 0
    %v1057 = vperm.slane %v999, 0
    %v1058 = vperm.slane %v1000, 0
    %v1059 = vperm.slane %v1001, 0
    %v1060 = vperm.slane %v1002, 0
    %v1061 = vperm.slane %v1003, 0
    %v1062 = vperm.slane %v1004, 0
    %v1063 = vperm.slane %v1005, 0
    %v1064 = vperm.slane %v391, 0
    %v1065 = vperm.slane %v1006, 0
    %v1066 = vperm.slane %v1007, 0
    %v1067 = vperm.slane %v1008, 0
    %v1068 = vperm.slane %v1009, 0
    %v1069 = vperm.slane %v1010, 0
    %v1070 = vperm.slane %v1011, 0
    %v1071 = vperm.slane %v1012, 0
    %v1072 = vperm.slane %v392, 0
    %v1073 = vperm.slane %v1013, 0
    %v1074 = vperm.slane %v1014, 0
    %v1075 = vperm.slane %v1015, 0
    %v1076 = vperm.slane %v1016, 0
    %v1077 = vperm.slane %v1017, 0
    %v1078 = vperm.slane %v1018, 0
    %v1079 = vperm.slane %v1019, 0
    %v1080 = vperm.slane %v393, 0
    %v1081 = vperm.slane %v1020, 0
    %v1082 = vperm.slane %v1021, 0
    %v1083 = vperm.slane %v1022, 0
    %v1084 = vperm.slane %v1023, 0
    %v1085 = vperm.slane %v1024, 0
    %v1086 = vperm.slane %v1025, 0
    %v1087 = vperm.slane %v1026, 0
    %v1088 = vperm.slane %v394, 0
    %v1089 = vperm.slane %v1027, 0
    %v1090 = vperm.slane %v1028, 0
    %v1091 = vperm.slane %v1029, 0
    %v1092 = vperm.slane %v1030, 0
    %v1093 = vperm.slane %v1031, 0
    %v1094 = vperm.slane %v1032, 0
    %v1095 = vperm.slane %v1033, 0
    %v1096 = vperm.slane %v395, 0
    %v1097 = vperm.slane %v1034, 0
    %v1098 = vperm.slane %v1035, 0
    %v1099 = vperm.slane %v1036, 0
    %v1100 = vperm.slane %v1037, 0
    %v1101 = vperm.slane %v1038, 0
    %v1102 = vperm.slane %v1039, 0
    %v1103 = vperm.slane %v1040, 0
    %v1104 = vperm.slane %v396, 0
    %v1105 = vperm.slane %v1041, 0
    %v1106 = vperm.slane %v1042, 0
    %v1107 = vperm.slane %v1043, 0
    %v1108 = vperm.slane %v1044, 0
    %v1109 = vperm.slane %v1045, 0
    %v1110 = vperm.slane %v1046, 0
    %v1111 = vperm.slane %v1047, 0
    %v1176 = vmul.f32 %v567, %v1048
    %v1177 = vmul.f32 %v585, %v1049
    %v1178 = vmul.f32 %v571, %v1050
    %v1179 = vmul.f32 %v587, %v1051
    %v1180 = vmul.f32 %v579, %v1052
    %v1181 = vmul.f32 %v589, %v1053
    %v1182 = vmul.f32 %v583, %v1054
    %v1183 = vmul.f32 %v591, %v1055
    %v1184 = vmul.f32 %v623, %v1056
    %v1185 = vmul.f32 %v641, %v1057
    %v1186 = vmul.f32 %v627, %v1058
    %v1187 = vmul.f32 %v643, %v1059
    %v1188 = vmul.f32 %v635, %v1060
    %v1189 = vmul.f32 %v645, %v1061
    %v1190 = vmul.f32 %v639, %v1062
    %v1191 = vmul.f32 %v647, %v1063
    %v1192 = vmul.f32 %v679, %v1064
    %v1193 = vmul.f32 %v697, %v1065
    %v1194 = vmul.f32 %v683, %v1066
    %v1195 = vmul.f32 %v699, %v1067
    %v1196 = vmul.f32 %v691, %v1068
    %v1197 = vmul.f32 %v701, %v1069
    %v1198 = vmul.f32 %v695, %v1070
    %v1199 = vmul.f32 %v703, %v1071
    %v1200 = vmul.f32 %v735, %v1072
    %v1201 = vmul.f32 %v753, %v1073
    %v1202 = vmul.f32 %v739, %v1074
    %v1203 = vmul.f32 %v755, %v1075
    %v1204 = vmul.f32 %v747, %v1076
    %v1205 = vmul.f32 %v757, %v1077
    %v1206 = vmul.f32 %v751, %v1078
    %v1207 = vmul.f32 %v759, %v1079
    %v1208 = vmul.f32 %v791, %v1080
    %v1209 = vmul.f32 %v809, %v1081
    %v1210 = vmul.f32 %v795, %v1082
    %v1211 = vmul.f32 %v811, %v1083
    %v1212 = vmul.f32 %v803, %v1084
    %v1213 = vmul.f32 %v813, %v1085
    %v1214 = vmul.f32 %v807, %v1086
    %v1215 = vmul.f32 %v815, %v1087
    %v1216 = vmul.f32 %v847, %v1088
    %v1217 = vmul.f32 %v865, %v1089
    %v1218 = vmul.f32 %v851, %v1090
    %v1219 = vmul.f32 %v867, %v1091
    %v1220 = vmul.f32 %v859, %v1092
    %v1221 = vmul.f32 %v869, %v1093
    %v1222 = vmul.f32 %v863, %v1094
    %v1223 = vmul.f32 %v871, %v1095
    %v1224 = vmul.f32 %v903, %v1096
    %v1225 = vmul.f32 %v921, %v1097
    %v1226 = vmul.f32 %v907, %v1098
    %v1227 = vmul.f32 %v923, %v1099
    %v1228 = vmul.f32 %v915, %v1100
    %v1229 = vmul.f32 %v925, %v1101
    %v1230 = vmul.f32 %v919, %v1102
    %v1231 = vmul.f32 %v927, %v1103
    %v1232 = vmul.f32 %v959, %v1104
    %v1233 = vmul.f32 %v977, %v1105
    %v1234 = vmul.f32 %v963, %v1106
    %v1235 = vmul.f32 %v979, %v1107
    %v1236 = vmul.f32 %v971, %v1108
    %v1237 = vmul.f32 %v981, %v1109
    %v1238 = vmul.f32 %v975, %v1110
    %v1239 = vmul.f32 %v983, %v1111
    %vm1240 = vcmask 125952
    %v1241 = vsel %vm1240, %v1176, 0.0
    %1242 = vadd.xlane.f32.xlu0 %v1241
    %v1243 = vpop.xlane.xlu0 %1242
    %v1244 = vsel %vm1240, %v1177, 0.0
    %1245 = vadd.xlane.f32.xlu0 %v1244
    %v1246 = vpop.xlane.xlu0 %1245
    %v1247 = vsel %vm1240, %v1178, 0.0
    %1248 = vadd.xlane.f32.xlu0 %v1247
    %v1249 = vpop.xlane.xlu0 %1248
    %v1250 = vsel %vm1240, %v1179, 0.0
    %1251 = vadd.xlane.f32.xlu0 %v1250
    %v1252 = vpop.xlane.xlu0 %1251
    %v1253 = vsel %vm1240, %v1180, 0.0
    %1254 = vadd.xlane.f32.xlu0 %v1253
    %v1255 = vpop.xlane.xlu0 %1254
    %v1256 = vsel %vm1240, %v1181, 0.0
    %1257 = vadd.xlane.f32.xlu0 %v1256
    %v1258 = vpop.xlane.xlu0 %1257
    %v1259 = vsel %vm1240, %v1182, 0.0
    %1260 = vadd.xlane.f32.xlu0 %v1259
    %v1261 = vpop.xlane.xlu0 %1260
    %v1262 = vsel %vm1240, %v1183, 0.0
    %1263 = vadd.xlane.f32.xlu0 %v1262
    %v1264 = vpop.xlane.xlu0 %1263
    %v1265 = vsel %vm1240, %v1184, 0.0
    %1266 = vadd.xlane.f32.xlu0 %v1265
    %v1267 = vpop.xlane.xlu0 %1266
    %v1268 = vsel %vm1240, %v1185, 0.0
    %1269 = vadd.xlane.f32.xlu0 %v1268
    %v1270 = vpop.xlane.xlu0 %1269
    %v1271 = vsel %vm1240, %v1186, 0.0
    %1272 = vadd.xlane.f32.xlu0 %v1271
    %v1273 = vpop.xlane.xlu0 %1272
    %v1274 = vsel %vm1240, %v1187, 0.0
    %1275 = vadd.xlane.f32.xlu0 %v1274
    %v1276 = vpop.xlane.xlu0 %1275
    %v1277 = vsel %vm1240, %v1188, 0.0
    %1278 = vadd.xlane.f32.xlu0 %v1277
    %v1279 = vpop.xlane.xlu0 %1278
    %v1280 = vsel %vm1240, %v1189, 0.0
    %1281 = vadd.xlane.f32.xlu0 %v1280
    %v1282 = vpop.xlane.xlu0 %1281
    %v1283 = vsel %vm1240, %v1190, 0.0
    %1284 = vadd.xlane.f32.xlu0 %v1283
    %v1285 = vpop.xlane.xlu0 %1284
    %v1286 = vsel %vm1240, %v1191, 0.0
    %1287 = vadd.xlane.f32.xlu0 %v1286
    %v1288 = vpop.xlane.xlu0 %1287
    %v1289 = vsel %vm1240, %v1192, 0.0
    %1290 = vadd.xlane.f32.xlu0 %v1289
    %v1291 = vpop.xlane.xlu0 %1290
    %v1292 = vsel %vm1240, %v1193, 0.0
    %1293 = vadd.xlane.f32.xlu0 %v1292
    %v1294 = vpop.xlane.xlu0 %1293
    %v1295 = vsel %vm1240, %v1194, 0.0
    %1296 = vadd.xlane.f32.xlu0 %v1295
    %v1297 = vpop.xlane.xlu0 %1296
    %v1298 = vsel %vm1240, %v1195, 0.0
    %1299 = vadd.xlane.f32.xlu0 %v1298
    %v1300 = vpop.xlane.xlu0 %1299
    %v1301 = vsel %vm1240, %v1196, 0.0
    %1302 = vadd.xlane.f32.xlu0 %v1301
    %v1303 = vpop.xlane.xlu0 %1302
    %v1304 = vsel %vm1240, %v1197, 0.0
    %1305 = vadd.xlane.f32.xlu0 %v1304
    %v1306 = vpop.xlane.xlu0 %1305
    %v1307 = vsel %vm1240, %v1198, 0.0
    %1308 = vadd.xlane.f32.xlu0 %v1307
    %v1309 = vpop.xlane.xlu0 %1308
    %v1310 = vsel %vm1240, %v1199, 0.0
    %1311 = vadd.xlane.f32.xlu0 %v1310
    %v1312 = vpop.xlane.xlu0 %1311
    %v1313 = vsel %vm1240, %v1200, 0.0
    %1314 = vadd.xlane.f32.xlu0 %v1313
    %v1315 = vpop.xlane.xlu0 %1314
    %v1316 = vsel %vm1240, %v1201, 0.0
    %1317 = vadd.xlane.f32.xlu0 %v1316
    %v1318 = vpop.xlane.xlu0 %1317
    %v1319 = vsel %vm1240, %v1202, 0.0
    %1320 = vadd.xlane.f32.xlu0 %v1319
    %v1321 = vpop.xlane.xlu0 %1320
    %v1322 = vsel %vm1240, %v1203, 0.0
    %1323 = vadd.xlane.f32.xlu0 %v1322
    %v1324 = vpop.xlane.xlu0 %1323
    %v1325 = vsel %vm1240, %v1204, 0.0
    %1326 = vadd.xlane.f32.xlu0 %v1325
    %v1327 = vpop.xlane.xlu0 %1326
    %v1328 = vsel %vm1240, %v1205, 0.0
    %1329 = vadd.xlane.f32.xlu0 %v1328
    %v1330 = vpop.xlane.xlu0 %1329
    %v1331 = vsel %vm1240, %v1206, 0.0
    %1332 = vadd.xlane.f32.xlu0 %v1331
    %v1333 = vpop.xlane.xlu0 %1332
    %v1334 = vsel %vm1240, %v1207, 0.0
    %1335 = vadd.xlane.f32.xlu0 %v1334
    %v1336 = vpop.xlane.xlu0 %1335
    %v1337 = vsel %vm1240, %v1208, 0.0
    %1338 = vadd.xlane.f32.xlu0 %v1337
    %v1339 = vpop.xlane.xlu0 %1338
    %v1340 = vsel %vm1240, %v1209, 0.0
    %1341 = vadd.xlane.f32.xlu0 %v1340
    %v1342 = vpop.xlane.xlu0 %1341
    %v1343 = vsel %vm1240, %v1210, 0.0
    %1344 = vadd.xlane.f32.xlu0 %v1343
    %v1345 = vpop.xlane.xlu0 %1344
    %v1346 = vsel %vm1240, %v1211, 0.0
    %1347 = vadd.xlane.f32.xlu0 %v1346
    %v1348 = vpop.xlane.xlu0 %1347
    %v1349 = vsel %vm1240, %v1212, 0.0
    %1350 = vadd.xlane.f32.xlu0 %v1349
    %v1351 = vpop.xlane.xlu0 %1350
    %v1352 = vsel %vm1240, %v1213, 0.0
    %1353 = vadd.xlane.f32.xlu0 %v1352
    %v1354 = vpop.xlane.xlu0 %1353
    %v1355 = vsel %vm1240, %v1214, 0.0
    %1356 = vadd.xlane.f32.xlu0 %v1355
    %v1357 = vpop.xlane.xlu0 %1356
    %v1358 = vsel %vm1240, %v1215, 0.0
    %1359 = vadd.xlane.f32.xlu0 %v1358
    %v1360 = vpop.xlane.xlu0 %1359
    %v1361 = vsel %vm1240, %v1216, 0.0
    %1362 = vadd.xlane.f32.xlu0 %v1361
    %v1363 = vpop.xlane.xlu0 %1362
    %v1364 = vsel %vm1240, %v1217, 0.0
    %1365 = vadd.xlane.f32.xlu0 %v1364
    %v1366 = vpop.xlane.xlu0 %1365
    %v1367 = vsel %vm1240, %v1218, 0.0
    %1368 = vadd.xlane.f32.xlu0 %v1367
    %v1369 = vpop.xlane.xlu0 %1368
    %v1370 = vsel %vm1240, %v1219, 0.0
    %1371 = vadd.xlane.f32.xlu0 %v1370
    %v1372 = vpop.xlane.xlu0 %1371
    %v1373 = vsel %vm1240, %v1220, 0.0
    %1374 = vadd.xlane.f32.xlu0 %v1373
    %v1375 = vpop.xlane.xlu0 %1374
    %v1376 = vsel %vm1240, %v1221, 0.0
    %1377 = vadd.xlane.f32.xlu0 %v1376
    %v1378 = vpop.xlane.xlu0 %1377
    %v1379 = vsel %vm1240, %v1222, 0.0
    %1380 = vadd.xlane.f32.xlu0 %v1379
    %v1381 = vpop.xlane.xlu0 %1380
    %v1382 = vsel %vm1240, %v1223, 0.0
    %1383 = vadd.xlane.f32.xlu0 %v1382
    %v1384 = vpop.xlane.xlu0 %1383
    %v1385 = vsel %vm1240, %v1224, 0.0
    %1386 = vadd.xlane.f32.xlu0 %v1385
    %v1387 = vpop.xlane.xlu0 %1386
    %v1388 = vsel %vm1240, %v1225, 0.0
    %1389 = vadd.xlane.f32.xlu0 %v1388
    %v1390 = vpop.xlane.xlu0 %1389
    %v1391 = vsel %vm1240, %v1226, 0.0
    %1392 = vadd.xlane.f32.xlu0 %v1391
    %v1393 = vpop.xlane.xlu0 %1392
    %v1394 = vsel %vm1240, %v1227, 0.0
    %1395 = vadd.xlane.f32.xlu0 %v1394
    %v1396 = vpop.xlane.xlu0 %1395
    %v1397 = vsel %vm1240, %v1228, 0.0
    %1398 = vadd.xlane.f32.xlu0 %v1397
    %v1399 = vpop.xlane.xlu0 %1398
    %v1400 = vsel %vm1240, %v1229, 0.0
    %1401 = vadd.xlane.f32.xlu0 %v1400
    %v1402 = vpop.xlane.xlu0 %1401
    %v1403 = vsel %vm1240, %v1230, 0.0
    %1404 = vadd.xlane.f32.xlu0 %v1403
    %v1405 = vpop.xlane.xlu0 %1404
    %v1406 = vsel %vm1240, %v1231, 0.0
    %1407 = vadd.xlane.f32.xlu0 %v1406
    %v1408 = vpop.xlane.xlu0 %1407
    %v1409 = vsel %vm1240, %v1232, 0.0
    %1410 = vadd.xlane.f32.xlu0 %v1409
    %v1411 = vpop.xlane.xlu0 %1410
    %v1412 = vsel %vm1240, %v1233, 0.0
    %1413 = vadd.xlane.f32.xlu0 %v1412
    %v1414 = vpop.xlane.xlu0 %1413
    %v1415 = vsel %vm1240, %v1234, 0.0
    %1416 = vadd.xlane.f32.xlu0 %v1415
    %v1417 = vpop.xlane.xlu0 %1416
    %v1418 = vsel %vm1240, %v1235, 0.0
    %1419 = vadd.xlane.f32.xlu0 %v1418
    %v1420 = vpop.xlane.xlu0 %1419
    %v1421 = vsel %vm1240, %v1236, 0.0
    %1422 = vadd.xlane.f32.xlu0 %v1421
    %v1423 = vpop.xlane.xlu0 %1422
    %v1424 = vsel %vm1240, %v1237, 0.0
    %1425 = vadd.xlane.f32.xlu0 %v1424
    %v1426 = vpop.xlane.xlu0 %1425
    %v1427 = vsel %vm1240, %v1238, 0.0
    %1428 = vadd.xlane.f32.xlu0 %v1427
    %v1429 = vpop.xlane.xlu0 %1428
    %v1430 = vsel %vm1240, %v1239, 0.0
    %1431 = vadd.xlane.f32.xlu0 %v1430
    %v1432 = vpop.xlane.xlu0 %1431
    %vm1433 = vcmp.lt.s32.totalorder %v84, 3
    %v1434 = vstv %s48
    %v1435 = vmul.f32 %v1434, %v1243
    %v1436 = vmul.f32 %v1434, %v1246
    %v1437 = vmul.f32 %v1434, %v1249
    %v1438 = vmul.f32 %v1434, %v1252
    %v1439 = vmul.f32 %v1434, %v1255
    %v1440 = vmul.f32 %v1434, %v1258
    %v1441 = vmul.f32 %v1434, %v1261
    %v1442 = vmul.f32 %v1434, %v1264
    %v1443 = vmul.f32 %v1434, %v1267
    %v1444 = vmul.f32 %v1434, %v1270
    %v1445 = vmul.f32 %v1434, %v1273
    %v1446 = vmul.f32 %v1434, %v1276
    %v1447 = vmul.f32 %v1434, %v1279
    %v1448 = vmul.f32 %v1434, %v1282
    %v1449 = vmul.f32 %v1434, %v1285
    %v1450 = vmul.f32 %v1434, %v1288
    %v1451 = vmul.f32 %v1434, %v1291
    %v1452 = vmul.f32 %v1434, %v1294
    %v1453 = vmul.f32 %v1434, %v1297
    %v1454 = vmul.f32 %v1434, %v1300
    %v1455 = vmul.f32 %v1434, %v1303
    %v1456 = vmul.f32 %v1434, %v1306
    %v1457 = vmul.f32 %v1434, %v1309
    %v1458 = vmul.f32 %v1434, %v1312
    %v1459 = vmul.f32 %v1434, %v1315
    %v1460 = vmul.f32 %v1434, %v1318
    %v1461 = vmul.f32 %v1434, %v1321
    %v1462 = vmul.f32 %v1434, %v1324
    %v1463 = vmul.f32 %v1434, %v1327
    %v1464 = vmul.f32 %v1434, %v1330
    %v1465 = vmul.f32 %v1434, %v1333
    %v1466 = vmul.f32 %v1434, %v1336
    %v1467 = vmul.f32 %v1434, %v1339
    %v1468 = vmul.f32 %v1434, %v1342
    %v1469 = vmul.f32 %v1434, %v1345
    %v1470 = vmul.f32 %v1434, %v1348
    %v1471 = vmul.f32 %v1434, %v1351
    %v1472 = vmul.f32 %v1434, %v1354
    %v1473 = vmul.f32 %v1434, %v1357
    %v1474 = vmul.f32 %v1434, %v1360
    %v1475 = vmul.f32 %v1434, %v1363
    %v1476 = vmul.f32 %v1434, %v1366
    %v1477 = vmul.f32 %v1434, %v1369
    %v1478 = vmul.f32 %v1434, %v1372
    %v1479 = vmul.f32 %v1434, %v1375
    %v1480 = vmul.f32 %v1434, %v1378
    %v1481 = vmul.f32 %v1434, %v1381
    %v1482 = vmul.f32 %v1434, %v1384
    %v1483 = vmul.f32 %v1434, %v1387
    %v1484 = vmul.f32 %v1434, %v1390
    %v1485 = vmul.f32 %v1434, %v1393
    %v1486 = vmul.f32 %v1434, %v1396
    %v1487 = vmul.f32 %v1434, %v1399
    %v1488 = vmul.f32 %v1434, %v1402
    %v1489 = vmul.f32 %v1434, %v1405
    %v1490 = vmul.f32 %v1434, %v1408
    %v1491 = vmul.f32 %v1434, %v1411
    %v1492 = vmul.f32 %v1434, %v1414
    %v1493 = vmul.f32 %v1434, %v1417
    %v1494 = vmul.f32 %v1434, %v1420
    %v1495 = vmul.f32 %v1434, %v1423
    %v1496 = vmul.f32 %v1434, %v1426
    %v1497 = vmul.f32 %v1434, %v1429
    %v1498 = vmul.f32 %v1434, %v1432
    %v1499 = vstv %s49
    %v1500 = vadd.f32 %v1435, %v1499
    %v1501 = vadd.f32 %v1436, %v1499
    %v1502 = vadd.f32 %v1437, %v1499
    %v1503 = vadd.f32 %v1438, %v1499
    %v1504 = vadd.f32 %v1439, %v1499
    %v1505 = vadd.f32 %v1440, %v1499
    %v1506 = vadd.f32 %v1441, %v1499
    %v1507 = vadd.f32 %v1442, %v1499
    %v1508 = vadd.f32 %v1443, %v1499
    %v1509 = vadd.f32 %v1444, %v1499
    %v1510 = vadd.f32 %v1445, %v1499
    %v1511 = vadd.f32 %v1446, %v1499
    %v1512 = vadd.f32 %v1447, %v1499
    %v1513 = vadd.f32 %v1448, %v1499
    %v1514 = vadd.f32 %v1449, %v1499
    %v1515 = vadd.f32 %v1450, %v1499
    %v1516 = vadd.f32 %v1451, %v1499
    %v1517 = vadd.f32 %v1452, %v1499
    %v1518 = vadd.f32 %v1453, %v1499
    %v1519 = vadd.f32 %v1454, %v1499
    %v1520 = vadd.f32 %v1455, %v1499
    %v1521 = vadd.f32 %v1456, %v1499
    %v1522 = vadd.f32 %v1457, %v1499
    %v1523 = vadd.f32 %v1458, %v1499
    %v1524 = vadd.f32 %v1459, %v1499
    %v1525 = vadd.f32 %v1460, %v1499
    %v1526 = vadd.f32 %v1461, %v1499
    %v1527 = vadd.f32 %v1462, %v1499
    %v1528 = vadd.f32 %v1463, %v1499
    %v1529 = vadd.f32 %v1464, %v1499
    %v1530 = vadd.f32 %v1465, %v1499
    %v1531 = vadd.f32 %v1466, %v1499
    %v1532 = vadd.f32 %v1467, %v1499
    %v1533 = vadd.f32 %v1468, %v1499
    %v1534 = vadd.f32 %v1469, %v1499
    %v1535 = vadd.f32 %v1470, %v1499
    %v1536 = vadd.f32 %v1471, %v1499
    %v1537 = vadd.f32 %v1472, %v1499
    %v1538 = vadd.f32 %v1473, %v1499
    %v1539 = vadd.f32 %v1474, %v1499
    %v1540 = vadd.f32 %v1475, %v1499
    %v1541 = vadd.f32 %v1476, %v1499
    %v1542 = vadd.f32 %v1477, %v1499
    %v1543 = vadd.f32 %v1478, %v1499
    %v1544 = vadd.f32 %v1479, %v1499
    %v1545 = vadd.f32 %v1480, %v1499
    %v1546 = vadd.f32 %v1481, %v1499
    %v1547 = vadd.f32 %v1482, %v1499
    %v1548 = vadd.f32 %v1483, %v1499
    %v1549 = vadd.f32 %v1484, %v1499
    %v1550 = vadd.f32 %v1485, %v1499
    %v1551 = vadd.f32 %v1486, %v1499
    %v1552 = vadd.f32 %v1487, %v1499
    %v1553 = vadd.f32 %v1488, %v1499
    %v1554 = vadd.f32 %v1489, %v1499
    %v1555 = vadd.f32 %v1490, %v1499
    %v1556 = vadd.f32 %v1491, %v1499
    %v1557 = vadd.f32 %v1492, %v1499
    %v1558 = vadd.f32 %v1493, %v1499
    %v1559 = vadd.f32 %v1494, %v1499
    %v1560 = vadd.f32 %v1495, %v1499
    %v1561 = vadd.f32 %v1496, %v1499
    %v1562 = vadd.f32 %v1497, %v1499
    %v1563 = vadd.f32 %v1498, %v1499
    %v1564 = vmax.f32 %v1500, 0.0
    %v1565 = vmax.f32 %v1501, 0.0
    %v1566 = vmax.f32 %v1502, 0.0
    %v1567 = vmax.f32 %v1503, 0.0
    %v1568 = vmax.f32 %v1504, 0.0
    %v1569 = vmax.f32 %v1505, 0.0
    %v1570 = vmax.f32 %v1506, 0.0
    %v1571 = vmax.f32 %v1507, 0.0
    %v1572 = vmax.f32 %v1508, 0.0
    %v1573 = vmax.f32 %v1509, 0.0
    %v1574 = vmax.f32 %v1510, 0.0
    %v1575 = vmax.f32 %v1511, 0.0
    %v1576 = vmax.f32 %v1512, 0.0
    %v1577 = vmax.f32 %v1513, 0.0
    %v1578 = vmax.f32 %v1514, 0.0
    %v1579 = vmax.f32 %v1515, 0.0
    %v1580 = vmax.f32 %v1516, 0.0
    %v1581 = vmax.f32 %v1517, 0.0
    %v1582 = vmax.f32 %v1518, 0.0
    %v1583 = vmax.f32 %v1519, 0.0
    %v1584 = vmax.f32 %v1520, 0.0
    %v1585 = vmax.f32 %v1521, 0.0
    %v1586 = vmax.f32 %v1522, 0.0
    %v1587 = vmax.f32 %v1523, 0.0
    %v1588 = vmax.f32 %v1524, 0.0
    %v1589 = vmax.f32 %v1525, 0.0
    %v1590 = vmax.f32 %v1526, 0.0
    %v1591 = vmax.f32 %v1527, 0.0
    %v1592 = vmax.f32 %v1528, 0.0
    %v1593 = vmax.f32 %v1529, 0.0
    %v1594 = vmax.f32 %v1530, 0.0
    %v1595 = vmax.f32 %v1531, 0.0
    %v1596 = vmax.f32 %v1532, 0.0
    %v1597 = vmax.f32 %v1533, 0.0
    %v1598 = vmax.f32 %v1534, 0.0
    %v1599 = vmax.f32 %v1535, 0.0
    %v1600 = vmax.f32 %v1536, 0.0
    %v1601 = vmax.f32 %v1537, 0.0
    %v1602 = vmax.f32 %v1538, 0.0
    %v1603 = vmax.f32 %v1539, 0.0
    %v1604 = vmax.f32 %v1540, 0.0
    %v1605 = vmax.f32 %v1541, 0.0
    %v1606 = vmax.f32 %v1542, 0.0
    %v1607 = vmax.f32 %v1543, 0.0
    %v1608 = vmax.f32 %v1544, 0.0
    %v1609 = vmax.f32 %v1545, 0.0
    %v1610 = vmax.f32 %v1546, 0.0
    %v1611 = vmax.f32 %v1547, 0.0
    %v1612 = vmax.f32 %v1548, 0.0
    %v1613 = vmax.f32 %v1549, 0.0
    %v1614 = vmax.f32 %v1550, 0.0
    %v1615 = vmax.f32 %v1551, 0.0
    %v1616 = vmax.f32 %v1552, 0.0
    %v1617 = vmax.f32 %v1553, 0.0
    %v1618 = vmax.f32 %v1554, 0.0
    %v1619 = vmax.f32 %v1555, 0.0
    %v1620 = vmax.f32 %v1556, 0.0
    %v1621 = vmax.f32 %v1557, 0.0
    %v1622 = vmax.f32 %v1558, 0.0
    %v1623 = vmax.f32 %v1559, 0.0
    %v1624 = vmax.f32 %v1560, 0.0
    %v1625 = vmax.f32 %v1561, 0.0
    %v1626 = vmax.f32 %v1562, 0.0
    %v1627 = vmax.f32 %v1563, 0.0
    %v1628 = vmin.f32 %v1564, 1.0
    %v1629 = vmin.f32 %v1565, 1.0
    %v1630 = vmin.f32 %v1566, 1.0
    %v1631 = vmin.f32 %v1567, 1.0
    %v1632 = vmin.f32 %v1568, 1.0
    %v1633 = vmin.f32 %v1569, 1.0
    %v1634 = vmin.f32 %v1570, 1.0
    %v1635 = vmin.f32 %v1571, 1.0
    %v1636 = vmin.f32 %v1572, 1.0
    %v1637 = vmin.f32 %v1573, 1.0
    %v1638 = vmin.f32 %v1574, 1.0
    %v1639 = vmin.f32 %v1575, 1.0
    %v1640 = vmin.f32 %v1576, 1.0
    %v1641 = vmin.f32 %v1577, 1.0
    %v1642 = vmin.f32 %v1578, 1.0
    %v1643 = vmin.f32 %v1579, 1.0
    %v1644 = vmin.f32 %v1580, 1.0
    %v1645 = vmin.f32 %v1581, 1.0
    %v1646 = vmin.f32 %v1582, 1.0
    %v1647 = vmin.f32 %v1583, 1.0
    %v1648 = vmin.f32 %v1584, 1.0
    %v1649 = vmin.f32 %v1585, 1.0
    %v1650 = vmin.f32 %v1586, 1.0
    %v1651 = vmin.f32 %v1587, 1.0
    %v1652 = vmin.f32 %v1588, 1.0
    %v1653 = vmin.f32 %v1589, 1.0
    %v1654 = vmin.f32 %v1590, 1.0
    %v1655 = vmin.f32 %v1591, 1.0
    %v1656 = vmin.f32 %v1592, 1.0
    %v1657 = vmin.f32 %v1593, 1.0
    %v1658 = vmin.f32 %v1594, 1.0
    %v1659 = vmin.f32 %v1595, 1.0
    %v1660 = vmin.f32 %v1596, 1.0
    %v1661 = vmin.f32 %v1597, 1.0
    %v1662 = vmin.f32 %v1598, 1.0
    %v1663 = vmin.f32 %v1599, 1.0
    %v1664 = vmin.f32 %v1600, 1.0
    %v1665 = vmin.f32 %v1601, 1.0
    %v1666 = vmin.f32 %v1602, 1.0
    %v1667 = vmin.f32 %v1603, 1.0
    %v1668 = vmin.f32 %v1604, 1.0
    %v1669 = vmin.f32 %v1605, 1.0
    %v1670 = vmin.f32 %v1606, 1.0
    %v1671 = vmin.f32 %v1607, 1.0
    %v1672 = vmin.f32 %v1608, 1.0
    %v1673 = vmin.f32 %v1609, 1.0
    %v1674 = vmin.f32 %v1610, 1.0
    %v1675 = vmin.f32 %v1611, 1.0
    %v1676 = vmin.f32 %v1612, 1.0
    %v1677 = vmin.f32 %v1613, 1.0
    %v1678 = vmin.f32 %v1614, 1.0
    %v1679 = vmin.f32 %v1615, 1.0
    %v1680 = vmin.f32 %v1616, 1.0
    %v1681 = vmin.f32 %v1617, 1.0
    %v1682 = vmin.f32 %v1618, 1.0
    %v1683 = vmin.f32 %v1619, 1.0
    %v1684 = vmin.f32 %v1620, 1.0
    %v1685 = vmin.f32 %v1621, 1.0
    %v1686 = vmin.f32 %v1622, 1.0
    %v1687 = vmin.f32 %v1623, 1.0
    %v1688 = vmin.f32 %v1624, 1.0
    %v1689 = vmin.f32 %v1625, 1.0
    %v1690 = vmin.f32 %v1626, 1.0
    %v1691 = vmin.f32 %v1627, 1.0
    %v1756 = vperm.slane %v1628, %v84
    %v1757 = vperm.slane %v1629, %v84
    %v1758 = vperm.slane %v1630, %v84
    %v1759 = vperm.slane %v1631, %v84
    %v1760 = vperm.slane %v1632, %v84
    %v1761 = vperm.slane %v1633, %v84
    %v1762 = vperm.slane %v1634, %v84
    %v1763 = vperm.slane %v1635, %v84
    %v1764 = vperm.slane %v1636, %v84
    %v1765 = vperm.slane %v1637, %v84
    %v1766 = vperm.slane %v1638, %v84
    %v1767 = vperm.slane %v1639, %v84
    %v1768 = vperm.slane %v1640, %v84
    %v1769 = vperm.slane %v1641, %v84
    %v1770 = vperm.slane %v1642, %v84
    %v1771 = vperm.slane %v1643, %v84
    %v1772 = vperm.slane %v1644, %v84
    %v1773 = vperm.slane %v1645, %v84
    %v1774 = vperm.slane %v1646, %v84
    %v1775 = vperm.slane %v1647, %v84
    %v1776 = vperm.slane %v1648, %v84
    %v1777 = vperm.slane %v1649, %v84
    %v1778 = vperm.slane %v1650, %v84
    %v1779 = vperm.slane %v1651, %v84
    %v1780 = vperm.slane %v1652, %v84
    %v1781 = vperm.slane %v1653, %v84
    %v1782 = vperm.slane %v1654, %v84
    %v1783 = vperm.slane %v1655, %v84
    %v1784 = vperm.slane %v1656, %v84
    %v1785 = vperm.slane %v1657, %v84
    %v1786 = vperm.slane %v1658, %v84
    %v1787 = vperm.slane %v1659, %v84
    %v1788 = vperm.slane %v1660, %v84
    %v1789 = vperm.slane %v1661, %v84
    %v1790 = vperm.slane %v1662, %v84
    %v1791 = vperm.slane %v1663, %v84
    %v1792 = vperm.slane %v1664, %v84
    %v1793 = vperm.slane %v1665, %v84
    %v1794 = vperm.slane %v1666, %v84
    %v1795 = vperm.slane %v1667, %v84
    %v1796 = vperm.slane %v1668, %v84
    %v1797 = vperm.slane %v1669, %v84
    %v1798 = vperm.slane %v1670, %v84
    %v1799 = vperm.slane %v1671, %v84
    %v1800 = vperm.slane %v1672, %v84
    %v1801 = vperm.slane %v1673, %v84
    %v1802 = vperm.slane %v1674, %v84
    %v1803 = vperm.slane %v1675, %v84
    %v1804 = vperm.slane %v1676, %v84
    %v1805 = vperm.slane %v1677, %v84
    %v1806 = vperm.slane %v1678, %v84
    %v1807 = vperm.slane %v1679, %v84
    %v1808 = vperm.slane %v1680, %v84
    %v1809 = vperm.slane %v1681, %v84
    %v1810 = vperm.slane %v1682, %v84
    %v1811 = vperm.slane %v1683, %v84
    %v1812 = vperm.slane %v1684, %v84
    %v1813 = vperm.slane %v1685, %v84
    %v1814 = vperm.slane %v1686, %v84
    %v1815 = vperm.slane %v1687, %v84
    %v1816 = vperm.slane %v1688, %v84
    %v1817 = vperm.slane %v1689, %v84
    %v1818 = vperm.slane %v1690, %v84
    %v1819 = vperm.slane %v1691, %v84
    %vm1820 = vcmask 1041409
    %v1821 = vsel %vm1820, %v1757, %v1756
    %vm1822 = vcmask 1042434
    %v1823 = vsel %vm1822, %v1758, %v1821
    %vm1824 = vcmask 1043459
    %v1825 = vsel %vm1824, %v1759, %v1823
    %vm1826 = vcmask 1044484
    %v1827 = vsel %vm1826, %v1760, %v1825
    %vm1828 = vcmask 1045509
    %v1829 = vsel %vm1828, %v1761, %v1827
    %vm1830 = vcmask 1046534
    %v1831 = vsel %vm1830, %v1762, %v1829
    %vm1832 = vcmask 1047559
    %v1833 = vsel %vm1832, %v1763, %v1831
    %v1834 = vsel %vm1820, %v1765, %v1764
    %v1835 = vsel %vm1822, %v1766, %v1834
    %v1836 = vsel %vm1824, %v1767, %v1835
    %v1837 = vsel %vm1826, %v1768, %v1836
    %v1838 = vsel %vm1828, %v1769, %v1837
    %v1839 = vsel %vm1830, %v1770, %v1838
    %v1840 = vsel %vm1832, %v1771, %v1839
    %v1841 = vsel %vm1820, %v1773, %v1772
    %v1842 = vsel %vm1822, %v1774, %v1841
    %v1843 = vsel %vm1824, %v1775, %v1842
    %v1844 = vsel %vm1826, %v1776, %v1843
    %v1845 = vsel %vm1828, %v1777, %v1844
    %v1846 = vsel %vm1830, %v1778, %v1845
    %v1847 = vsel %vm1832, %v1779, %v1846
    %v1848 = vsel %vm1820, %v1781, %v1780
    %v1849 = vsel %vm1822, %v1782, %v1848
    %v1850 = vsel %vm1824, %v1783, %v1849
    %v1851 = vsel %vm1826, %v1784, %v1850
    %v1852 = vsel %vm1828, %v1785, %v1851
    %v1853 = vsel %vm1830, %v1786, %v1852
    %v1854 = vsel %vm1832, %v1787, %v1853
    %v1855 = vsel %vm1820, %v1789, %v1788
    %v1856 = vsel %vm1822, %v1790, %v1855
    %v1857 = vsel %vm1824, %v1791, %v1856
    %v1858 = vsel %vm1826, %v1792, %v1857
    %v1859 = vsel %vm1828, %v1793, %v1858
    %v1860 = vsel %vm1830, %v1794, %v1859
    %v1861 = vsel %vm1832, %v1795, %v1860
    %v1862 = vsel %vm1820, %v1797, %v1796
    %v1863 = vsel %vm1822, %v1798, %v1862
    %v1864 = vsel %vm1824, %v1799, %v1863
    %v1865 = vsel %vm1826, %v1800, %v1864
    %v1866 = vsel %vm1828, %v1801, %v1865
    %v1867 = vsel %vm1830, %v1802, %v1866
    %v1868 = vsel %vm1832, %v1803, %v1867
    %v1869 = vsel %vm1820, %v1805, %v1804
    %v1870 = vsel %vm1822, %v1806, %v1869
    %v1871 = vsel %vm1824, %v1807, %v1870
    %v1872 = vsel %vm1826, %v1808, %v1871
    %v1873 = vsel %vm1828, %v1809, %v1872
    %v1874 = vsel %vm1830, %v1810, %v1873
    %v1875 = vsel %vm1832, %v1811, %v1874
    %v1876 = vsel %vm1820, %v1813, %v1812
    %v1877 = vsel %vm1822, %v1814, %v1876
    %v1878 = vsel %vm1824, %v1815, %v1877
    %v1879 = vsel %vm1826, %v1816, %v1878
    %v1880 = vsel %vm1828, %v1817, %v1879
    %v1881 = vsel %vm1830, %v1818, %v1880
    %v1882 = vsel %vm1832, %v1819, %v1881
    %v1955 = vperm.slane %v1243, %v84
    %v1956 = vperm.slane %v1246, %v84
    %v1957 = vperm.slane %v1249, %v84
    %v1958 = vperm.slane %v1252, %v84
    %v1959 = vperm.slane %v1255, %v84
    %v1960 = vperm.slane %v1258, %v84
    %v1961 = vperm.slane %v1261, %v84
    %v1962 = vperm.slane %v1264, %v84
    %v1963 = vperm.slane %v1267, %v84
    %v1964 = vperm.slane %v1270, %v84
    %v1965 = vperm.slane %v1273, %v84
    %v1966 = vperm.slane %v1276, %v84
    %v1967 = vperm.slane %v1279, %v84
    %v1968 = vperm.slane %v1282, %v84
    %v1969 = vperm.slane %v1285, %v84
    %v1970 = vperm.slane %v1288, %v84
    %v1971 = vperm.slane %v1291, %v84
    %v1972 = vperm.slane %v1294, %v84
    %v1973 = vperm.slane %v1297, %v84
    %v1974 = vperm.slane %v1300, %v84
    %v1975 = vperm.slane %v1303, %v84
    %v1976 = vperm.slane %v1306, %v84
    %v1977 = vperm.slane %v1309, %v84
    %v1978 = vperm.slane %v1312, %v84
    %v1979 = vperm.slane %v1315, %v84
    %v1980 = vperm.slane %v1318, %v84
    %v1981 = vperm.slane %v1321, %v84
    %v1982 = vperm.slane %v1324, %v84
    %v1983 = vperm.slane %v1327, %v84
    %v1984 = vperm.slane %v1330, %v84
    %v1985 = vperm.slane %v1333, %v84
    %v1986 = vperm.slane %v1336, %v84
    %v1987 = vperm.slane %v1339, %v84
    %v1988 = vperm.slane %v1342, %v84
    %v1989 = vperm.slane %v1345, %v84
    %v1990 = vperm.slane %v1348, %v84
    %v1991 = vperm.slane %v1351, %v84
    %v1992 = vperm.slane %v1354, %v84
    %v1993 = vperm.slane %v1357, %v84
    %v1994 = vperm.slane %v1360, %v84
    %v1995 = vperm.slane %v1363, %v84
    %v1996 = vperm.slane %v1366, %v84
    %v1997 = vperm.slane %v1369, %v84
    %v1998 = vperm.slane %v1372, %v84
    %v1999 = vperm.slane %v1375, %v84
    %v2000 = vperm.slane %v1378, %v84
    %v2001 = vperm.slane %v1381, %v84
    %v2002 = vperm.slane %v1384, %v84
    %v2003 = vperm.slane %v1387, %v84
    %v2004 = vperm.slane %v1390, %v84
    %v2005 = vperm.slane %v1393, %v84
    %v2006 = vperm.slane %v1396, %v84
    %v2007 = vperm.slane %v1399, %v84
    %v2008 = vperm.slane %v1402, %v84
    %v2009 = vperm.slane %v1405, %v84
    %v2010 = vperm.slane %v1408, %v84
    %v2011 = vperm.slane %v1411, %v84
    %v2012 = vperm.slane %v1414, %v84
    %v2013 = vperm.slane %v1417, %v84
    %v2014 = vperm.slane %v1420, %v84
    %v2015 = vperm.slane %v1423, %v84
    %v2016 = vperm.slane %v1426, %v84
    %v2017 = vperm.slane %v1429, %v84
    %v2018 = vperm.slane %v1432, %v84
    %v2019 = vsel %vm1820, %v1956, %v1955
    %v2020 = vsel %vm1822, %v1957, %v2019
    %v2021 = vsel %vm1824, %v1958, %v2020
    %v2022 = vsel %vm1826, %v1959, %v2021
    %v2023 = vsel %vm1828, %v1960, %v2022
    %v2024 = vsel %vm1830, %v1961, %v2023
    %v2025 = vsel %vm1832, %v1962, %v2024
    %v2026 = vsel %vm1820, %v1964, %v1963
    %v2027 = vsel %vm1822, %v1965, %v2026
    %v2028 = vsel %vm1824, %v1966, %v2027
    %v2029 = vsel %vm1826, %v1967, %v2028
    %v2030 = vsel %vm1828, %v1968, %v2029
    %v2031 = vsel %vm1830, %v1969, %v2030
    %v2032 = vsel %vm1832, %v1970, %v2031
    %v2033 = vsel %vm1820, %v1972, %v1971
    %v2034 = vsel %vm1822, %v1973, %v2033
    %v2035 = vsel %vm1824, %v1974, %v2034
    %v2036 = vsel %vm1826, %v1975, %v2035
    %v2037 = vsel %vm1828, %v1976, %v2036
    %v2038 = vsel %vm1830, %v1977, %v2037
    %v2039 = vsel %vm1832, %v1978, %v2038
    %v2040 = vsel %vm1820, %v1980, %v1979
    %v2041 = vsel %vm1822, %v1981, %v2040
    %v2042 = vsel %vm1824, %v1982, %v2041
    %v2043 = vsel %vm1826, %v1983, %v2042
    %v2044 = vsel %vm1828, %v1984, %v2043
    %v2045 = vsel %vm1830, %v1985, %v2044
    %v2046 = vsel %vm1832, %v1986, %v2045
    %v2047 = vsel %vm1820, %v1988, %v1987
    %v2048 = vsel %vm1822, %v1989, %v2047
    %v2049 = vsel %vm1824, %v1990, %v2048
    %v2050 = vsel %vm1826, %v1991, %v2049
    %v2051 = vsel %vm1828, %v1992, %v2050
    %v2052 = vsel %vm1830, %v1993, %v2051
    %v2053 = vsel %vm1832, %v1994, %v2052
    %v2054 = vsel %vm1820, %v1996, %v1995
    %v2055 = vsel %vm1822, %v1997, %v2054
    %v2056 = vsel %vm1824, %v1998, %v2055
    %v2057 = vsel %vm1826, %v1999, %v2056
    %v2058 = vsel %vm1828, %v2000, %v2057
    %v2059 = vsel %vm1830, %v2001, %v2058
    %v2060 = vsel %vm1832, %v2002, %v2059
    %v2061 = vsel %vm1820, %v2004, %v2003
    %v2062 = vsel %vm1822, %v2005, %v2061
    %v2063 = vsel %vm1824, %v2006, %v2062
    %v2064 = vsel %vm1826, %v2007, %v2063
    %v2065 = vsel %vm1828, %v2008, %v2064
    %v2066 = vsel %vm1830, %v2009, %v2065
    %v2067 = vsel %vm1832, %v2010, %v2066
    %v2068 = vsel %vm1820, %v2012, %v2011
    %v2069 = vsel %vm1822, %v2013, %v2068
    %v2070 = vsel %vm1824, %v2014, %v2069
    %v2071 = vsel %vm1826, %v2015, %v2070
    %v2072 = vsel %vm1828, %v2016, %v2071
    %v2073 = vsel %vm1830, %v2017, %v2072
    %v2074 = vsel %vm1832, %v2018, %v2073
    %v2083 = vsel %vm1433, %v1833, %v2025
    %v2084 = vsel %vm1433, %v1840, %v2032
    %v2085 = vsel %vm1433, %v1847, %v2039
    %v2086 = vsel %vm1433, %v1854, %v2046
    %v2087 = vsel %vm1433, %v1861, %v2053
    %v2088 = vsel %vm1433, %v1868, %v2060
    %v2089 = vsel %vm1433, %v1875, %v2067
    %v2090 = vsel %vm1433, %v1882, %v2074
    %2091 = vxpose.xlu0.b32.start [1/16] %v2083, 128
    %2092 = vxpose.xlu0.b32.cont [2/16] %v2084, 128
    %2093 = vxpose.xlu0.b32.cont [3/16] %v2085, 128
    %2094 = vxpose.xlu0.b32.cont [4/16] %v2086, 128
    %2095 = vxpose.xlu0.b32.cont [5/16] %v2087, 128
    %2096 = vxpose.xlu0.b32.cont [6/16] %v2088, 128
    %2097 = vxpose.xlu0.b32.cont [7/16] %v2089, 128
    %2098 = vxpose.xlu0.b32.cont [8/16] %v2090, 128
    %2099 = vxpose.xlu0.b32.cont [9/16] 0.0, 128
    %2100 = vxpose.xlu0.b32.cont [10/16] 0.0, 128
    %2101 = vxpose.xlu0.b32.cont [11/16] 0.0, 128
    %2102 = vxpose.xlu0.b32.cont [12/16] 0.0, 128
    %2103 = vxpose.xlu0.b32.cont [13/16] 0.0, 128
    %2104 = vxpose.xlu0.b32.cont [14/16] 0.0, 128
    %2105 = vxpose.xlu0.b32.cont [15/16] 0.0, 128
    %2106 = vxpose.xlu0.b32.end [16/16] 0.0, 128
    %v2107 = vpop.trf.xlu0
    %v2108 = vpop.trf.xlu0
    %v2109 = vpop.trf.xlu0
    %v2110 = vpop.trf.xlu0
    %v2111 = vpop.trf.xlu0
    %v2112 = vpop.trf.xlu0
    %v2113 = vpop.trf.xlu0
    %v2114 = vpop.trf.xlu0
    %v2115 = vpop.trf.xlu0
    %v2116 = vpop.trf.xlu0
    %v2117 = vpop.trf.xlu0
    %v2118 = vpop.trf.xlu0
    %v2119 = vpop.trf.xlu0
    %v2120 = vpop.trf.xlu0
    %v2121 = vpop.trf.xlu0
    %v2122 = vpop.trf.xlu0
    %2124 = vrot.lane.b32.xlu0 %v2107, 120
    %v2125 = vpop.permute.xlu0 %2124
    %2127 = vrot.lane.b32.xlu0 %v2107, 112
    %v2128 = vpop.permute.xlu0 %2127
    %2130 = vrot.lane.b32.xlu0 %v2107, 104
    %v2131 = vpop.permute.xlu0 %2130
    %2133 = vrot.lane.b32.xlu0 %v2107, 96
    %v2134 = vpop.permute.xlu0 %2133
    %2136 = vrot.lane.b32.xlu0 %v2107, 88
    %v2137 = vpop.permute.xlu0 %2136
    %2139 = vrot.lane.b32.xlu0 %v2107, 80
    %v2140 = vpop.permute.xlu0 %2139
    %2142 = vrot.lane.b32.xlu0 %v2107, 72
    %v2143 = vpop.permute.xlu0 %2142
    %v2145 = vrot.slane %v2128, 4
    %v2146 = vsel %vm536, %v2145, %v2107
    %v2148 = vunpack.c.l.s4 1983009808
    %v2149 = vunpack.c.0.s8 %v2148
    %v2150 = vperm.slane %v2146, %v2149
    %v2151 = vrot.slane %v2131, 4
    %v2152 = vsel %vm536, %v2151, %v2125
    %v2154 = vunpack.c.l.s4 1983009808
    %v2155 = vunpack.c.0.s8 %v2154
    %v2156 = vperm.slane %v2152, %v2155
    %v2157 = vrot.slane %v2140, 4
    %v2158 = vsel %vm536, %v2157, %v2134
    %v2160 = vunpack.c.l.s4 1983009808
    %v2161 = vunpack.c.0.s8 %v2160
    %v2162 = vperm.slane %v2158, %v2161
    %v2163 = vrot.slane %v2143, 4
    %v2164 = vsel %vm536, %v2163, %v2137
    %v2166 = vunpack.c.l.s4 1983009808
    %v2167 = vunpack.c.0.s8 %v2166
    %v2168 = vperm.slane %v2164, %v2167
    %v2169 = vrot.slane %v2156, 4
    %v2170 = vsel %vm536, %v2169, %v2150
    %v2171 = vrot.slane %v2150, 4
    %v2172 = vsel %vm536, %v2156, %v2171
    %v2174 = vunpack.c.l.s4 1934713408
    %v2175 = vunpack.c.0.s8 %v2174
    %v2176 = vperm.slane %v2170, %v2175
    %v2178 = vunpack.c.l.s4 1934713408
    %v2179 = vunpack.c.0.s8 %v2178
    %v2180 = vperm.slane %v2172, %v2179
    %v2181 = vrot.slane %v2168, 4
    %v2182 = vsel %vm536, %v2181, %v2162
    %v2183 = vrot.slane %v2162, 4
    %v2184 = vsel %vm536, %v2168, %v2183
    %v2186 = vunpack.c.l.s4 1934713408
    %v2187 = vunpack.c.0.s8 %v2186
    %v2188 = vperm.slane %v2182, %v2187
    %v2190 = vunpack.c.l.s4 1934713408
    %v2191 = vunpack.c.0.s8 %v2190
    %v2192 = vperm.slane %v2184, %v2191
    %v2193 = vrot.slane %v2188, 4
    %v2194 = vsel %vm536, %v2193, %v2176
    %v2195 = vrot.slane %v2176, 4
    %v2196 = vsel %vm536, %v2188, %v2195
    %v2197 = vrot.slane %v2192, 4
    %v2198 = vsel %vm536, %v2197, %v2180
    %v2199 = vrot.slane %v2180, 4
    %v2200 = vsel %vm536, %v2192, %v2199
    %vm2201 = vcmask 64512
    %2202 = vst.msk [vmem:[#allocation10] sm:$0xff] %vm2201, %v2194
    %2203 = vst.msk [vmem:[#allocation10 + $0x8] sm:$0xff] %vm2201, %v2196
    %2204 = vst.msk [vmem:[#allocation10 + $0x10] sm:$0xff] %vm2201, %v2198
    %2205 = vst.msk [vmem:[#allocation10 + $0x18] sm:$0xff] %vm2201, %v2200
    // Predicated region
    $region26: #{tpu_custom_call.1} parent=1 // pred_check
      _
    $region27: #{tpu_custom_call.1} parent=1 // pred_check_branch
      %2207 = sbr.rel (0) target = $region29
    $region28: #{tpu_custom_call.1} parent=1 // pred_region
      %2209 = vsyncadd [#allocation7], 0
      %s2210 = sshll.u32 [#allocation10], 4
      %s2211 = int_to_ptr.vmem [resolvable:$true] %s2210
      %s2212 = sshll.u32 %s4, 4
      %s2213 = int_to_ptr.hbm [resolvable:$true] %s2212
      %2218 = dma.vmem_to_hbm [thread:$0]  %s2211, 512, %s2213, [#allocation7], 128, 128, 8
    $region29: #{tpu_custom_call.1} parent=1 // pred_fallthru
      _
    // Predicated region
    $region30: #{tpu_custom_call.1} parent=1 // pred_check
      _
    $region31: #{tpu_custom_call.1} parent=1 // pred_check_branch
      %2220 = sbr.rel (0) target = $region33
    $region32: #{tpu_custom_call.1} parent=1 // pred_region
      %2222 = dma.done [#allocation7], 512
    $region33: #{tpu_custom_call.1} parent=1 // pred_fallthru
      _
    %2223 = vsyncpa [#allocation6], 1
    %2224 = vsyncpa [#allocation7], 1
    %2225 = vsyncpa [#allocation8], 1
  %2226 = vsyncmov [#allocation3]
  %s2227 = vpop.sfrf %2226
  %p2228 = scmp.eq.s32.totalorder %s2227, 0
  %p2229 = pneg %p2228
  %2231 = shalt.err (%p2229)

</llo_original>
